<compile_context>
chip_gen: v6e
topology: v6e:2x2x1
jax: 0.10.0
libtpu: 0.0.40
codegen_flags: <defaults>
</compile_context>

<pallas_src>
import functools

import jax
import jax.numpy as jnp
import numpy as np
from jax import lax
from jax.experimental import pallas as pl
from jax.experimental.pallas import tpu as pltpu


# ------------------------------ fused Pallas kernel ---------------------------------

def _fused_forward_kernel(x_ref, m1_ref, t1_ref, m2_ref, t2_ref, m3_ref, t3_ref,
                          eye_ref, fc1w_ref, fc1b_ref, fc2w_ref, fc2b_ref,
                          pool_ref, o_ref, *, channels, na2):
    """Whole AnchorBoxPredictor forward for one batch element, VMEM-resident."""
    f32 = jnp.float32
    x = x_ref[...]                                                      # (1, Cin*H*W)

    # layer1..3: conv + folded BN + ReLU, each pre-lowered to a single MXU matmul.
    a = jnp.maximum(jnp.dot(x, m1_ref[...], preferred_element_type=f32) + t1_ref[...], 0.0)
    a = jnp.maximum(jnp.dot(a, m2_ref[...], preferred_element_type=f32) + t2_ref[...], 0.0)
    a = jnp.maximum(jnp.dot(a, m3_ref[...], preferred_element_type=f32) + t3_ref[...], 0.0)
    # a: (1, 4*C) — conv3 columns pre-pruned/ordered so the 4 maxpool taps are contiguous
    # channel groups at lane offsets 0, C, 2C, 3C.

    # layer3 maxpool (2x2, stride 2, floor -> 1x1): elementwise max of 4 static slices.
    p = jnp.maximum(
        jnp.maximum(a[:, 0:channels], a[:, channels:2 * channels]),
        jnp.maximum(a[:, 2 * channels:3 * channels], a[:, 3 * channels:4 * channels]),
    )                                                                   # (1, C)

    # Pivot channels from lanes to sublanes: (1, C) -> (C, 1) via identity mask + lane
    # reduction (avoids in-kernel reshape/transpose).
    pcol = jnp.sum(eye_ref[...] * p, axis=1, keepdims=True)             # (C, 1)

    # fc1: Dropout(eval)=identity, Linear(1, hid) + ReLU  (outer product + bias).
    h = jnp.maximum(pcol * fc1w_ref[...] + fc1b_ref[...], 0.0)          # (C, hid)
    # fc2: Dropout(eval)=identity, Linear(hid, 8) + ReLU.
    h = jnp.maximum(jnp.dot(h, fc2w_ref[...], preferred_element_type=f32)
                    + fc2b_ref[...], 0.0)                               # (C, 8)

    # AdaptiveAvgPool2d((ps, ps)) over the (1, 8) map as one small matmul; cols = i*ps+j.
    g = jnp.dot(h, pool_ref[...], preferred_element_type=f32)           # (C, ps*ps)

    # Channel split (torch.split on dim=1): sigmoid on rows [:na2] (tx_ty), tanh on
    # rows [na2:] (tw_th).  One full-block store; no masked partial sublane stores.
    row = lax.broadcasted_iota(jnp.int32, g.shape, 0)
    o_ref[...] = jnp.where(row < na2, jax.nn.sigmoid(g), jnp.tanh(g))


# ------------------------- one-time parameter preparation ----------------------------

def _conv_select(h, w, ho, wo, stride, pad=1, ksz=3):
    """Binary tensor S[h*w, ho*wo, k] = 1 iff input pixel (h,w) is tap k of output (i,j)."""
    s = np.zeros((h * w, ho * wo, ksz * ksz), np.float32)
    for i in range(ho):
        for j in range(wo):
            for kh in range(ksz):
                for kw in range(ksz):
                    hh = i * stride + kh - pad
                    ww = j * stride + kw - pad
                    if 0 <= hh < h and 0 <= ww < w:
                        s[hh * w + ww, i * wo + j, kh * ksz + kw] = 1.0
    return s


def _adaptive_pool_matrix(win, ps):
    """AdaptiveAvgPool2d((ps, ps)) applied to a (1, win) map; output cols ordered i*ps+j."""
    m = np.zeros((win, ps * ps), np.float32)
    for i in range(ps):
        for j in range(ps):
            ws = (j * win) // ps
            we = -(-((j + 1) * win) // ps)
            m[ws:we, i * ps + j] = 1.0 / (we - ws)
    return m


def prepare_params(p, *, num_anchors, height, width, patch_size):
    """Lower parameters once: fold BN, turn each conv into a dense matmul matrix
    (padding/stride/BN-scale baked in), prune conv3 to the maxpool taps, pre-transpose
    FC weights, build pooling/pivot constants. Runs outside the per-step forward."""
    eps = 1e-5
    c = num_anchors * 4
    hid = int(p['fc1_w'].shape[0])
    fc2_out = int(p['fc2_w'].shape[0])

    def fold(bias, gamma, beta):
        a = gamma / jnp.sqrt(1.0 + eps)          # BN eval: running_mean=0, running_var=1
        return a, bias * a + beta

    def out_hw(h, w, stride):
        return (h + 2 - 3) // stride + 1, (w + 2 - 3) // stride + 1

    h1, w1 = out_hw(height, width, 3)
    h2, w2 = out_hw(h1, w1, 2)
    h3, w3 = out_hw(h2, w2, 1)

    def conv_matrix(wt, scale, shift, hin, win, hout, wout, stride, chw_input):
        co, ci = int(wt.shape[0]), int(wt.shape[1])
        sel = jnp.asarray(_conv_select(hin, win, hout, wout, stride))   # (hin*win, hout*wout, 9)
        wk = wt.reshape(co, ci, 9)
        if chw_input:     # input flattened as (ci, h, w) — the module's NCHW input
            m = jnp.einsum('pqk,ock->cpqo', sel, wk).reshape(ci * hin * win, hout * wout * co)
        else:             # input flattened as (h, w, ci) — previous conv's output ordering
            m = jnp.einsum('pqk,ock->pcqo', sel, wk).reshape(hin * win * ci, hout * wout * co)
        m = m * jnp.tile(scale, hout * wout)[None, :]
        t = jnp.tile(shift, hout * wout)[None, :]
        return m.astype(jnp.float32), t.astype(jnp.float32)

    s1, sh1 = fold(p['b1'], p['g1'], p['beta1'])
    s2, sh2 = fold(p['b2'], p['g2'], p['beta2'])
    s3, sh3 = fold(p['b3'], p['g3'], p['beta3'])

    m1, t1 = conv_matrix(p['w1'], s1, sh1, height, width, h1, w1, 3, True)
    m2, t2 = conv_matrix(p['w2'], s2, sh2, h1, w1, h2, w2, 2, False)
    m3, t3 = conv_matrix(p['w3'], s3, sh3, h2, w2, h3, w3, 1, False)

    # 2x2/stride-2 floor max pool must reduce conv3's map to 1x1 (nn.Linear(1, .) contract).
    assert h3 // 2 == 1 and w3 // 2 == 1, (h3, w3)
    # Keep only the conv3 output columns the maxpool reads (pixels (0,0),(0,1),(1,0),(1,1)),
    # ordered tap-major / channel-minor -> in-kernel pool offsets are 0, C, 2C, 3C.
    keep = np.concatenate([np.arange(c) + (di * w3 + dj) * c
                           for di in range(2) for dj in range(2)])
    m3 = m3[:, keep]
    t3 = t3[:, keep]

    arrays = dict(
        m1=m1, t1=t1, m2=m2, t2=t2, m3=m3, t3=t3,
        eye=jnp.asarray(np.eye(c, dtype=np.float32)),
        fc1w=p['fc1_w'].reshape(1, hid).astype(jnp.float32),
        fc1b=p['fc1_b'].reshape(1, hid).astype(jnp.float32),
        fc2w=jnp.transpose(p['fc2_w']).astype(jnp.float32),
        fc2b=p['fc2_b'].reshape(1, fc2_out).astype(jnp.float32),
        pool=jnp.asarray(_adaptive_pool_matrix(fc2_out, patch_size)),
    )
    cfg = dict(channels=c, na2=num_anchors * 2, patch_size=patch_size)
    return arrays, cfg


# ----------------------------------- forward ----------------------------------------

def anchor_box_predictor_forward(x_nchw, params, *, channels, na2, patch_size):
    n = x_nchw.shape[0]
    kin = x_nchw.shape[1] * x_nchw.shape[2] * x_nchw.shape[3]
    pp = patch_size * patch_size
    x_flat = x_nchw.reshape(n, 1, kin)                    # boundary layout plumbing only

    weights = (params['m1'], params['t1'], params['m2'], params['t2'],
               params['m3'], params['t3'], params['eye'],
               params['fc1w'], params['fc1b'], params['fc2w'], params['fc2b'],
               params['pool'])

    kernel = functools.partial(_fused_forward_kernel, channels=channels, na2=na2)

    # x block: last two dims (1, kin) equal the full array dims -> layout-legal block.
    in_specs = [pl.BlockSpec((None, 1, kin), lambda b: (b, 0, 0))]
    # Weights: full-array blocks, grid-invariant index maps (stay resident in VMEM).
    in_specs += [pl.BlockSpec(w.shape, lambda b: (0, 0)) for w in weights]

    out = pl.pallas_call(
        kernel,
        grid=(n,),
        in_specs=in_specs,
        out_specs=pl.BlockSpec((None, channels, pp), lambda b: (b, 0, 0)),
        out_shape=jax.ShapeDtypeStruct((n, channels, pp), jnp.float32),
        compiler_params=pltpu.CompilerParams(dimension_semantics=("parallel",)),
    )(x_flat, *weights)
    return out.reshape(n, channels, patch_size, patch_size)


# ------------------------- params + pure-JAX reference -------------------------------

def init_params(key, feature_size, num_anchors):
    c = num_anchors * 4
    hid = num_anchors * 4 * 8
    ks = jax.random.split(key, 16)
    nrm = lambda k, shape, s=0.1: (s * jax.random.normal(k, shape)).astype(jnp.float32)
    return dict(
        w1=nrm(ks[0], (c, feature_size, 3, 3)), b1=nrm(ks[1], (c,)),
        g1=1.0 + nrm(ks[2], (c,)), beta1=nrm(ks[3], (c,)),
        w2=nrm(ks[4], (c, c, 3, 3)), b2=nrm(ks[5], (c,)),
        g2=1.0 + nrm(ks[6], (c,)), beta2=nrm(ks[7], (c,)),
        w3=nrm(ks[8], (c, c, 3, 3)), b3=nrm(ks[9], (c,)),
        g3=1.0 + nrm(ks[10], (c,)), beta3=nrm(ks[11], (c,)),
        fc1_w=nrm(ks[12], (hid, 1)), fc1_b=nrm(ks[13], (hid,)),
        fc2_w=nrm(ks[14], (8, hid)), fc2_b=nrm(ks[15], (8,)),
    )


def reference_forward(x, p, *, patch_size, num_anchors):
    eps = 1e-5

    def cbr(x, w, b, g, beta, stride):
        y = jax.lax.conv_general_dilated(
            x, w, (stride, stride), ((1, 1), (1, 1)),
            dimension_numbers=('NCHW', 'OIHW', 'NCHW'))
        y = y + b[None, :, None, None]
        y = y * (g / jnp.sqrt(1.0 + eps))[None, :, None, None] + beta[None, :, None, None]
        return jnp.maximum(y, 0.0)

    y = cbr(x, p['w1'], p['b1'], p['g1'], p['beta1'], 3)
    y = cbr(y, p['w2'], p['b2'], p['g2'], p['beta2'], 2)
    y = cbr(y, p['w3'], p['b3'], p['g3'], p['beta3'], 1)
    n, c, h, w = y.shape
    ho, wo = h // 2, w // 2
    y = y[:, :, :ho * 2, :wo * 2].reshape(n, c, ho, 2, wo, 2).max(axis=(3, 5))
    y = jnp.maximum(jnp.einsum('nchw,ow->ncho', y, p['fc1_w']) + p['fc1_b'], 0.0)
    y = jnp.maximum(jnp.einsum('nchw,ow->ncho', y, p['fc2_w']) + p['fc2_b'], 0.0)
    n, c, h, w = y.shape

    def pool_mat(insz, outsz):
        m = np.zeros((outsz, insz), dtype=np.float32)
        for i in range(outsz):
            s = (i * insz) // outsz
            e = -(-((i + 1) * insz) // outsz)
            m[i, s:e] = 1.0 / (e - s)
        return jnp.asarray(m)

    ah, aw = pool_mat(h, patch_size), pool_mat(w, patch_size)
    y = jnp.einsum('ih,nchw,jw->ncij', ah, y, aw)
    na2 = num_anchors * 2
    return jnp.concatenate([jax.nn.sigmoid(y[:, :na2]), jnp.tanh(y[:, na2:])], axis=1)


# ------------------------------------- main ------------------------------------------

if __name__ == "__main__":
    feature_size, num_anchors, patch_size = 4, 3, 2
    key = jax.random.PRNGKey(0)
    kx, kp = jax.random.split(key)
    # H = W = 16: layer1 (s=3) -> 6, layer2 (s=2) -> 3, layer3 (s=1) -> 3, maxpool -> 1x1,
    # matching the nn.Linear(1, .) requirement on the trailing axis.
    x = jax.random.normal(kx, (2, feature_size, 16, 16), dtype=jnp.float32)
    params = init_params(kp, feature_size, num_anchors)

    prep, cfg = prepare_params(params, num_anchors=num_anchors,
                               height=16, width=16, patch_size=patch_size)
    fwd = jax.jit(functools.partial(anchor_box_predictor_forward, **cfg))
    out = jax.block_until_ready(fwd(x, prep))

    assert out.shape == (2, num_anchors * 4, patch_size, patch_size), out.shape
    ref = reference_forward(x, params, patch_size=patch_size, num_anchors=num_anchors)
    np.testing.assert_allclose(np.asarray(out), np.asarray(ref), atol=1e-3, rtol=1e-3)
    print("KERNEL_OK")
</pallas_src>

<mosaic_0001>
module attributes {stable_mosaic.version = 11 : i64} {
  func.func @_fused_forward_kernel(%arg0: i32, %arg1: memref<1x1x1024xf32, #tpu.memory_space<vmem>>, %arg2: memref<1024x432xf32, #tpu.memory_space<vmem>>, %arg3: memref<1x432xf32, #tpu.memory_space<vmem>>, %arg4: memref<432x108xf32, #tpu.memory_space<vmem>>, %arg5: memref<1x108xf32, #tpu.memory_space<vmem>>, %arg6: memref<108x48xf32, #tpu.memory_space<vmem>>, %arg7: memref<1x48xf32, #tpu.memory_space<vmem>>, %arg8: memref<12x12xf32, #tpu.memory_space<vmem>>, %arg9: memref<1x96xf32, #tpu.memory_space<vmem>>, %arg10: memref<1x96xf32, #tpu.memory_space<vmem>>, %arg11: memref<96x8xf32, #tpu.memory_space<vmem>>, %arg12: memref<1x8xf32, #tpu.memory_space<vmem>>, %arg13: memref<8x4xf32, #tpu.memory_space<vmem>>, %arg14: memref<1x12x4xf32, #tpu.memory_space<vmem>>) attributes {dimension_semantics = [#tpu.dimension_semantics<parallel>], iteration_bounds = array<i64: 2>, scalar_prefetch = 0 : i64, scratch_operands = 0 : i64, tpu.core_type = #tpu.core_type<tc>, window_params = [{transform_indices = @transform_0, window_bounds = array<i64: 1, 1, 1024>}, {pipeline_mode = #tpu.pipeline_mode<synchronous>, transform_indices = @transform_1, window_bounds = array<i64: 1024, 432>}, {pipeline_mode = #tpu.pipeline_mode<synchronous>, transform_indices = @transform_2, window_bounds = array<i64: 1, 432>}, {pipeline_mode = #tpu.pipeline_mode<synchronous>, transform_indices = @transform_3, window_bounds = array<i64: 432, 108>}, {pipeline_mode = #tpu.pipeline_mode<synchronous>, transform_indices = @transform_4, window_bounds = array<i64: 1, 108>}, {pipeline_mode = #tpu.pipeline_mode<synchronous>, transform_indices = @transform_5, window_bounds = array<i64: 108, 48>}, {pipeline_mode = #tpu.pipeline_mode<synchronous>, transform_indices = @transform_6, window_bounds = array<i64: 1, 48>}, {pipeline_mode = #tpu.pipeline_mode<synchronous>, transform_indices = @transform_7, window_bounds = array<i64: 12, 12>}, {pipeline_mode = #tpu.pipeline_mode<synchronous>, transform_indices = @transform_8, window_bounds = array<i64: 1, 96>}, {pipeline_mode = #tpu.pipeline_mode<synchronous>, transform_indices = @transform_9, window_bounds = array<i64: 1, 96>}, {pipeline_mode = #tpu.pipeline_mode<synchronous>, transform_indices = @transform_10, window_bounds = array<i64: 96, 8>}, {pipeline_mode = #tpu.pipeline_mode<synchronous>, transform_indices = @transform_11, window_bounds = array<i64: 1, 8>}, {pipeline_mode = #tpu.pipeline_mode<synchronous>, transform_indices = @transform_12, window_bounds = array<i64: 8, 4>}, {transform_indices = @transform_13, window_bounds = array<i64: 1, 12, 4>}]} {
    %c0 = arith.constant 0 : index
    %c0_0 = arith.constant 0 : index
    %c0_1 = arith.constant 0 : index
    %0 = vector.load %arg1[%c0, %c0_0, %c0_1] : memref<1x1x1024xf32, #tpu.memory_space<vmem>>, vector<1x1x1024xf32>
    %1 = vector.shape_cast %0 : vector<1x1x1024xf32> to vector<1x1024xf32>
    %c0_2 = arith.constant 0 : index
    %c0_3 = arith.constant 0 : index
    %2 = vector.load %arg2[%c0_2, %c0_3] : memref<1024x432xf32, #tpu.memory_space<vmem>>, vector<1024x432xf32>
    %cst = arith.constant dense<0.000000e+00> : vector<1x432xf32>
    %3 = tpu.matmul %1, %2, %cst {dimension_numbers = #tpu.dot_dimension_numbers<[1], [0], [0], [1], [0, 0, 1, 1], [], []>} : vector<1x1024xf32>, vector<1024x432xf32>, vector<1x432xf32> -> vector<1x432xf32>
    %c0_4 = arith.constant 0 : index
    %c0_5 = arith.constant 0 : index
    %4 = vector.load %arg3[%c0_4, %c0_5] : memref<1x432xf32, #tpu.memory_space<vmem>>, vector<1x432xf32>
    %5 = arith.addf %3, %4 : vector<1x432xf32>
    %cst_6 = arith.constant 0.000000e+00 : f32
    %6 = vector.broadcast %cst_6 : f32 to vector<1x432xf32>
    %7 = arith.maximumf %5, %6 : vector<1x432xf32>
    %c0_7 = arith.constant 0 : index
    %c0_8 = arith.constant 0 : index
    %8 = vector.load %arg4[%c0_7, %c0_8] : memref<432x108xf32, #tpu.memory_space<vmem>>, vector<432x108xf32>
    %cst_9 = arith.constant dense<0.000000e+00> : vector<1x108xf32>
    %9 = tpu.matmul %7, %8, %cst_9 {dimension_numbers = #tpu.dot_dimension_numbers<[1], [0], [0], [1], [0, 0, 1, 1], [], []>} : vector<1x432xf32>, vector<432x108xf32>, vector<1x108xf32> -> vector<1x108xf32>
    %c0_10 = arith.constant 0 : index
    %c0_11 = arith.constant 0 : index
    %10 = vector.load %arg5[%c0_10, %c0_11] : memref<1x108xf32, #tpu.memory_space<vmem>>, vector<1x108xf32>
    %11 = arith.addf %9, %10 : vector<1x108xf32>
    %cst_12 = arith.constant 0.000000e+00 : f32
    %12 = vector.broadcast %cst_12 : f32 to vector<1x108xf32>
    %13 = arith.maximumf %11, %12 : vector<1x108xf32>
    %c0_13 = arith.constant 0 : index
    %c0_14 = arith.constant 0 : index
    %14 = vector.load %arg6[%c0_13, %c0_14] : memref<108x48xf32, #tpu.memory_space<vmem>>, vector<108x48xf32>
    %cst_15 = arith.constant dense<0.000000e+00> : vector<1x48xf32>
    %15 = tpu.matmul %13, %14, %cst_15 {dimension_numbers = #tpu.dot_dimension_numbers<[1], [0], [0], [1], [0, 0, 1, 1], [], []>} : vector<1x108xf32>, vector<108x48xf32>, vector<1x48xf32> -> vector<1x48xf32>
    %c0_16 = arith.constant 0 : index
    %c0_17 = arith.constant 0 : index
    %16 = vector.load %arg7[%c0_16, %c0_17] : memref<1x48xf32, #tpu.memory_space<vmem>>, vector<1x48xf32>
    %17 = arith.addf %15, %16 : vector<1x48xf32>
    %cst_18 = arith.constant 0.000000e+00 : f32
    %18 = vector.broadcast %cst_18 : f32 to vector<1x48xf32>
    %19 = arith.maximumf %17, %18 : vector<1x48xf32>
    %20 = vector.extract_strided_slice %19 {offsets = [0, 0], sizes = [1, 12], strides = [1, 1]} : vector<1x48xf32> to vector<1x12xf32>
    %21 = vector.extract_strided_slice %19 {offsets = [0, 12], sizes = [1, 12], strides = [1, 1]} : vector<1x48xf32> to vector<1x12xf32>
    %22 = arith.maximumf %20, %21 : vector<1x12xf32>
    %23 = vector.extract_strided_slice %19 {offsets = [0, 24], sizes = [1, 12], strides = [1, 1]} : vector<1x48xf32> to vector<1x12xf32>
    %24 = vector.extract_strided_slice %19 {offsets = [0, 36], sizes = [1, 12], strides = [1, 1]} : vector<1x48xf32> to vector<1x12xf32>
    %25 = arith.maximumf %23, %24 : vector<1x12xf32>
    %26 = arith.maximumf %22, %25 : vector<1x12xf32>
    %c0_19 = arith.constant 0 : index
    %c0_20 = arith.constant 0 : index
    %27 = vector.load %arg8[%c0_19, %c0_20] : memref<12x12xf32, #tpu.memory_space<vmem>>, vector<12x12xf32>
    %28 = vector.broadcast %26 : vector<1x12xf32> to vector<12x12xf32>
    %29 = arith.mulf %27, %28 : vector<12x12xf32>
    %cst_21 = arith.constant dense<0.000000e+00> : vector<12xf32>
    %30 = vector.multi_reduction <add>, %29, %cst_21 [1] : vector<12x12xf32> to vector<12xf32>
    %31 = vector.shape_cast %30 : vector<12xf32> to vector<12x1xf32>
    %c0_22 = arith.constant 0 : index
    %c0_23 = arith.constant 0 : index
    %32 = vector.load %arg9[%c0_22, %c0_23] : memref<1x96xf32, #tpu.memory_space<vmem>>, vector<1x96xf32>
    %33 = vector.broadcast %31 : vector<12x1xf32> to vector<12x96xf32>
    %34 = vector.broadcast %32 : vector<1x96xf32> to vector<12x96xf32>
    %35 = arith.mulf %33, %34 : vector<12x96xf32>
    %c0_24 = arith.constant 0 : index
    %c0_25 = arith.constant 0 : index
    %36 = vector.load %arg10[%c0_24, %c0_25] : memref<1x96xf32, #tpu.memory_space<vmem>>, vector<1x96xf32>
    %37 = vector.broadcast %36 : vector<1x96xf32> to vector<12x96xf32>
    %38 = arith.addf %35, %37 : vector<12x96xf32>
    %cst_26 = arith.constant 0.000000e+00 : f32
    %39 = vector.broadcast %cst_26 : f32 to vector<12x96xf32>
    %40 = arith.maximumf %38, %39 : vector<12x96xf32>
    %c0_27 = arith.constant 0 : index
    %c0_28 = arith.constant 0 : index
    %41 = vector.load %arg11[%c0_27, %c0_28] : memref<96x8xf32, #tpu.memory_space<vmem>>, vector<96x8xf32>
    %cst_29 = arith.constant dense<0.000000e+00> : vector<12x8xf32>
    %42 = tpu.matmul %40, %41, %cst_29 {dimension_numbers = #tpu.dot_dimension_numbers<[1], [0], [0], [1], [0, 0, 1, 1], [], []>} : vector<12x96xf32>, vector<96x8xf32>, vector<12x8xf32> -> vector<12x8xf32>
    %c0_30 = arith.constant 0 : index
    %c0_31 = arith.constant 0 : index
    %43 = vector.load %arg12[%c0_30, %c0_31] : memref<1x8xf32, #tpu.memory_space<vmem>>, vector<1x8xf32>
    %44 = vector.broadcast %43 : vector<1x8xf32> to vector<12x8xf32>
    %45 = arith.addf %42, %44 : vector<12x8xf32>
    %cst_32 = arith.constant 0.000000e+00 : f32
    %46 = vector.broadcast %cst_32 : f32 to vector<12x8xf32>
    %47 = arith.maximumf %45, %46 : vector<12x8xf32>
    %c0_33 = arith.constant 0 : index
    %c0_34 = arith.constant 0 : index
    %48 = vector.load %arg13[%c0_33, %c0_34] : memref<8x4xf32, #tpu.memory_space<vmem>>, vector<8x4xf32>
    %cst_35 = arith.constant dense<0.000000e+00> : vector<12x4xf32>
    %49 = tpu.matmul %47, %48, %cst_35 {dimension_numbers = #tpu.dot_dimension_numbers<[1], [0], [0], [1], [0, 0, 1, 1], [], []>} : vector<12x8xf32>, vector<8x4xf32>, vector<12x4xf32> -> vector<12x4xf32>
    %50 = tpu.iota {dimensions = array<i32: 0>} : vector<12x4xi32>
    %c6_i32 = arith.constant 6 : i32
    %51 = vector.broadcast %c6_i32 : i32 to vector<12x4xi32>
    %52 = arith.cmpi slt, %50, %51 : vector<12x4xi32>
    %53 = arith.negf %49 : vector<12x4xf32>
    %54 = math.exp %53 : vector<12x4xf32>
    %cst_36 = arith.constant 1.000000e+00 : f32
    %55 = vector.broadcast %cst_36 : f32 to vector<12x4xf32>
    %56 = arith.addf %55, %54 : vector<12x4xf32>
    %57 = arith.divf %55, %56 : vector<12x4xf32>
    %58 = math.tanh %49 : vector<12x4xf32>
    %59 = arith.select %52, %57, %58 : vector<12x4xi1>, vector<12x4xf32>
    %c0_37 = arith.constant 0 : index
    %c0_38 = arith.constant 0 : index
    %c0_39 = arith.constant 0 : index
    %60 = vector.load %arg14[%c0_37, %c0_38, %c0_39] : memref<1x12x4xf32, #tpu.memory_space<vmem>>, vector<1x12x4xf32>
    %61 = vector.shape_cast %60 : vector<1x12x4xf32> to vector<12x4xf32>
    %62 = vector.shape_cast %59 : vector<12x4xf32> to vector<1x12x4xf32>
    tpu.vector_store %arg14[%c0_37, %c0_38, %c0_39], %62 {strides = array<i32>} : memref<1x12x4xf32, #tpu.memory_space<vmem>>, vector<1x12x4xf32>,
    return
  }
  func.func @transform_0(%arg0: i32) -> (i32, i32, i32) {
    %c0_i32 = arith.constant 0 : i32
    %c0_i32_0 = arith.constant 0 : i32
    %c0_i32_1 = arith.constant 0 : i32
    return %arg0, %c0_i32, %c0_i32_0 : i32, i32, i32
  }
  func.func @transform_1(%arg0: i32) -> (i32, i32) {
    %c0_i32 = arith.constant 0 : i32
    %c0_i32_0 = arith.constant 0 : i32
    %c0_i32_1 = arith.constant 0 : i32
    return %c0_i32, %c0_i32_0 : i32, i32
  }
  func.func @transform_2(%arg0: i32) -> (i32, i32) {
    %c0_i32 = arith.constant 0 : i32
    %c0_i32_0 = arith.constant 0 : i32
    %c0_i32_1 = arith.constant 0 : i32
    return %c0_i32, %c0_i32_0 : i32, i32
  }
  func.func @transform_3(%arg0: i32) -> (i32, i32) {
    %c0_i32 = arith.constant 0 : i32
    %c0_i32_0 = arith.constant 0 : i32
    %c0_i32_1 = arith.constant 0 : i32
    return %c0_i32, %c0_i32_0 : i32, i32
  }
  func.func @transform_4(%arg0: i32) -> (i32, i32) {
    %c0_i32 = arith.constant 0 : i32
    %c0_i32_0 = arith.constant 0 : i32
    %c0_i32_1 = arith.constant 0 : i32
    return %c0_i32, %c0_i32_0 : i32, i32
  }
  func.func @transform_5(%arg0: i32) -> (i32, i32) {
    %c0_i32 = arith.constant 0 : i32
    %c0_i32_0 = arith.constant 0 : i32
    %c0_i32_1 = arith.constant 0 : i32
    return %c0_i32, %c0_i32_0 : i32, i32
  }
  func.func @transform_6(%arg0: i32) -> (i32, i32) {
    %c0_i32 = arith.constant 0 : i32
    %c0_i32_0 = arith.constant 0 : i32
    %c0_i32_1 = arith.constant 0 : i32
    return %c0_i32, %c0_i32_0 : i32, i32
  }
  func.func @transform_7(%arg0: i32) -> (i32, i32) {
    %c0_i32 = arith.constant 0 : i32
    %c0_i32_0 = arith.constant 0 : i32
    %c0_i32_1 = arith.constant 0 : i32
    return %c0_i32, %c0_i32_0 : i32, i32
  }
  func.func @transform_8(%arg0: i32) -> (i32, i32) {
    %c0_i32 = arith.constant 0 : i32
    %c0_i32_0 = arith.constant 0 : i32
    %c0_i32_1 = arith.constant 0 : i32
    return %c0_i32, %c0_i32_0 : i32, i32
  }
  func.func @transform_9(%arg0: i32) -> (i32, i32) {
    %c0_i32 = arith.constant 0 : i32
    %c0_i32_0 = arith.constant 0 : i32
    %c0_i32_1 = arith.constant 0 : i32
    return %c0_i32, %c0_i32_0 : i32, i32
  }
  func.func @transform_10(%arg0: i32) -> (i32, i32) {
    %c0_i32 = arith.constant 0 : i32
    %c0_i32_0 = arith.constant 0 : i32
    %c0_i32_1 = arith.constant 0 : i32
    return %c0_i32, %c0_i32_0 : i32, i32
  }
  func.func @transform_11(%arg0: i32) -> (i32, i32) {
    %c0_i32 = arith.constant 0 : i32
    %c0_i32_0 = arith.constant 0 : i32
    %c0_i32_1 = arith.constant 0 : i32
    return %c0_i32, %c0_i32_0 : i32, i32
  }
  func.func @transform_12(%arg0: i32) -> (i32, i32) {
    %c0_i32 = arith.constant 0 : i32
    %c0_i32_0 = arith.constant 0 : i32
    %c0_i32_1 = arith.constant 0 : i32
    return %c0_i32, %c0_i32_0 : i32, i32
  }
  func.func @transform_13(%arg0: i32) -> (i32, i32, i32) {
    %c0_i32 = arith.constant 0 : i32
    %c0_i32_0 = arith.constant 0 : i32
    %c0_i32_1 = arith.constant 0 : i32
    return %arg0, %c0_i32, %c0_i32_0 : i32, i32, i32
  }
}

</mosaic_0001>

<llo_original>
// kernel: anchor_box_predictor_forward.1
$region0: #{anchor_box_predictor_forward.1}
  #allocation0 [shape = 'u32[]', space=smem, size = 0x4, offset = 0x4, fixed_abs, tag = 'smem constant byte address 0x4 - core index']
  #allocation1 [shape = 'u32[144,128]{1,0:T(1,128)}', space=vmem, size = 0x12000, scoped, tag = 'internal scratch']
  %s0 = inlined_call_operand.vmem [shape: f32[2,1,1024], index: 0, kind: input, shape index: {}]
  %s1 = inlined_call_operand.vmem [shape: f32[1024,432], index: 1, kind: input, shape index: {}]
  %s2 = inlined_call_operand.vmem [shape: f32[1,432], index: 2, kind: input, shape index: {}]
  %s3 = inlined_call_operand.vmem [shape: f32[432,108], index: 3, kind: input, shape index: {}]
  %s4 = inlined_call_operand.vmem [shape: f32[1,108], index: 4, kind: input, shape index: {}]
  %s5 = inlined_call_operand.vmem [shape: f32[108,48], index: 5, kind: input, shape index: {}]
  %s6 = inlined_call_operand.vmem [shape: f32[1,48], index: 6, kind: input, shape index: {}]
  %s7 = inlined_call_operand.vmem [shape: f32[12,12], index: 7, kind: input, shape index: {}]
  %s8 = inlined_call_operand.vmem [shape: f32[1,96], index: 8, kind: input, shape index: {}]
  %s9 = inlined_call_operand.vmem [shape: f32[1,96], index: 9, kind: input, shape index: {}]
  %s10 = inlined_call_operand.vmem [shape: f32[96,8], index: 10, kind: input, shape index: {}]
  %s11 = inlined_call_operand.vmem [shape: f32[1,8], index: 11, kind: input, shape index: {}]
  %s12 = inlined_call_operand.vmem [shape: f32[8,4], index: 12, kind: input, shape index: {}]
  %s13 = inlined_call_operand.vmem [shape: f32[2,12,4], index: 13, kind: output, shape index: {}]
  %s14 = sld [smem:[#allocation0]]
  $region85: #{anchor_box_predictor_forward.1} parent=0
    _
  %s16 = ssub.s32 1, %s14
  %s17 = scalar_select 0, %s16, %s14
  loop: start=0, step=1, limit=4
  $region2: #{anchor_box_predictor_forward.1} parent=0 // loop_pre_header
    _
  $region3: #{anchor_box_predictor_forward.1} parent=0 // loop_header
    %s19 = sphi 0, %s23
    %p20 = scmp.ge.s32.totalorder %s19, 4
    %s29 = sphi 0, %s31
    %s32 = sphi 0, %s29
    %s33 = sphi 0, %s32
    %s49 = sphi 0, %s33
    %s53 = sphi 0, %s53
    %s55 = sphi 0, %s53
    %s56 = sphi 0, %s55
    %s70 = sphi 0, %s56
    %s74 = sphi 0, %s74
    %s76 = sphi 0, %s74
    %s77 = sphi 0, %s76
    %s91 = sphi 0, %s77
    %s95 = sphi 0, %s95
    %s97 = sphi 0, %s95
    %s98 = sphi 0, %s97
    %s112 = sphi 0, %s98
    %s116 = sphi 0, %s116
    %s118 = sphi 0, %s116
    %s119 = sphi 0, %s118
    %s133 = sphi 0, %s119
    %s137 = sphi 0, %s137
    %s139 = sphi 0, %s137
    %s140 = sphi 0, %s139
    %s154 = sphi 0, %s140
    %s158 = sphi 0, %s158
    %s160 = sphi 0, %s158
    %s161 = sphi 0, %s160
    %s175 = sphi 0, %s161
    %s179 = sphi 0, %s179
    %s181 = sphi 0, %s179
    %s182 = sphi 0, %s181
    %s196 = sphi 0, %s182
    %s200 = sphi 0, %s200
    %s202 = sphi 0, %s200
    %s203 = sphi 0, %s202
    %s217 = sphi 0, %s203
    %s221 = sphi 0, %s221
    %s223 = sphi 0, %s221
    %s224 = sphi 0, %s223
    %s238 = sphi 0, %s224
    %s242 = sphi 0, %s242
    %s244 = sphi 0, %s242
    %s245 = sphi 0, %s244
    %s259 = sphi 0, %s245
    %s263 = sphi 0, %s263
    %s265 = sphi 0, %s263
    %s266 = sphi 0, %s265
    %s280 = sphi 0, %s266
    %s284 = sphi 0, %s284
    %s286 = sphi 0, %s284
    %s287 = sphi 0, %s286
    %s301 = sphi 0, %s287
    %s307 = sphi 0, %s309
    %s310 = sphi 0, %s307
    %s311 = sphi 0, %s310
    %s327 = sphi 0, %s311
  $region4: #{anchor_box_predictor_forward.1} parent=0 // loop_header_branch
    %22 = sbr.rel (%p20) target = $region8
  $region5: #{anchor_box_predictor_forward.1} parent=0 // loop_body
    %s24 = ssub.s32 %s19, 1
    %s25 = ssub.s32 %s19, 2
    %s26 = sadd.s32 %s19, 1
    %s27 = ssub.s32 %s19, %s26
    %p28 = scmp.eq.s32.totalorder %s27, 0
    %s30 = sadd.s32 %s29, 1
    %s31 = scalar_select %p28, %s29, %s30
    %p34 = pneg %p28
    %p35 = scmp.eq.s32.totalorder %s19, 1
    %p36 = por %p34, %p35
    %p37 = scmp.ne.s32.totalorder %s29, %s32
    %p38 = scmp.eq.s32.totalorder %s19, 0
    %p39 = por %p37, %p38
    %p40 = scmp.ne.s32.totalorder %s29, %s32
    %p41 = scmp.eq.s32.totalorder %s24, 1
    %p42 = por %p40, %p41
    %p43 = scmp.ne.s32.totalorder %s32, %s33
    %p44 = scmp.eq.s32.totalorder %s24, 0
    %p45 = por %p43, %p44
    %p46 = scmp.ne.s32.totalorder %s32, %s33
    %p47 = scmp.eq.s32.totalorder %s25, 1
    %p48 = por %p46, %p47
    %p50 = scmp.ne.s32.totalorder %s33, %s49
    %p51 = scmp.eq.s32.totalorder %s25, 0
    %p52 = por %p50, %p51
    %s54 = sadd.s32 %s53, 1
    %p57 = scmp.eq.s32.totalorder %s19, 1
    %p58 = scmp.ne.s32.totalorder %s53, %s55
    %p59 = scmp.eq.s32.totalorder %s19, 0
    %p60 = por %p58, %p59
    %p61 = scmp.ne.s32.totalorder %s53, %s55
    %p62 = scmp.eq.s32.totalorder %s24, 1
    %p63 = por %p61, %p62
    %p64 = scmp.ne.s32.totalorder %s55, %s56
    %p65 = scmp.eq.s32.totalorder %s24, 0
    %p66 = por %p64, %p65
    %p67 = scmp.ne.s32.totalorder %s55, %s56
    %p68 = scmp.eq.s32.totalorder %s25, 1
    %p69 = por %p67, %p68
    %p71 = scmp.ne.s32.totalorder %s56, %s70
    %p72 = scmp.eq.s32.totalorder %s25, 0
    %p73 = por %p71, %p72
    %s75 = sadd.s32 %s74, 1
    %p78 = scmp.eq.s32.totalorder %s19, 1
    %p79 = scmp.ne.s32.totalorder %s74, %s76
    %p80 = scmp.eq.s32.totalorder %s19, 0
    %p81 = por %p79, %p80
    %p82 = scmp.ne.s32.totalorder %s74, %s76
    %p83 = scmp.eq.s32.totalorder %s24, 1
    %p84 = por %p82, %p83
    %p85 = scmp.ne.s32.totalorder %s76, %s77
    %p86 = scmp.eq.s32.totalorder %s24, 0
    %p87 = por %p85, %p86
    %p88 = scmp.ne.s32.totalorder %s76, %s77
    %p89 = scmp.eq.s32.totalorder %s25, 1
    %p90 = por %p88, %p89
    %p92 = scmp.ne.s32.totalorder %s77, %s91
    %p93 = scmp.eq.s32.totalorder %s25, 0
    %p94 = por %p92, %p93
    %s96 = sadd.s32 %s95, 1
    %p99 = scmp.eq.s32.totalorder %s19, 1
    %p100 = scmp.ne.s32.totalorder %s95, %s97
    %p101 = scmp.eq.s32.totalorder %s19, 0
    %p102 = por %p100, %p101
    %p103 = scmp.ne.s32.totalorder %s95, %s97
    %p104 = scmp.eq.s32.totalorder %s24, 1
    %p105 = por %p103, %p104
    %p106 = scmp.ne.s32.totalorder %s97, %s98
    %p107 = scmp.eq.s32.totalorder %s24, 0
    %p108 = por %p106, %p107
    %p109 = scmp.ne.s32.totalorder %s97, %s98
    %p110 = scmp.eq.s32.totalorder %s25, 1
    %p111 = por %p109, %p110
    %p113 = scmp.ne.s32.totalorder %s98, %s112
    %p114 = scmp.eq.s32.totalorder %s25, 0
    %p115 = por %p113, %p114
    %s117 = sadd.s32 %s116, 1
    %p120 = scmp.eq.s32.totalorder %s19, 1
    %p121 = scmp.ne.s32.totalorder %s116, %s118
    %p122 = scmp.eq.s32.totalorder %s19, 0
    %p123 = por %p121, %p122
    %p124 = scmp.ne.s32.totalorder %s116, %s118
    %p125 = scmp.eq.s32.totalorder %s24, 1
    %p126 = por %p124, %p125
    %p127 = scmp.ne.s32.totalorder %s118, %s119
    %p128 = scmp.eq.s32.totalorder %s24, 0
    %p129 = por %p127, %p128
    %p130 = scmp.ne.s32.totalorder %s118, %s119
    %p131 = scmp.eq.s32.totalorder %s25, 1
    %p132 = por %p130, %p131
    %p134 = scmp.ne.s32.totalorder %s119, %s133
    %p135 = scmp.eq.s32.totalorder %s25, 0
    %p136 = por %p134, %p135
    %s138 = sadd.s32 %s137, 1
    %p141 = scmp.eq.s32.totalorder %s19, 1
    %p142 = scmp.ne.s32.totalorder %s137, %s139
    %p143 = scmp.eq.s32.totalorder %s19, 0
    %p144 = por %p142, %p143
    %p145 = scmp.ne.s32.totalorder %s137, %s139
    %p146 = scmp.eq.s32.totalorder %s24, 1
    %p147 = por %p145, %p146
    %p148 = scmp.ne.s32.totalorder %s139, %s140
    %p149 = scmp.eq.s32.totalorder %s24, 0
    %p150 = por %p148, %p149
    %p151 = scmp.ne.s32.totalorder %s139, %s140
    %p152 = scmp.eq.s32.totalorder %s25, 1
    %p153 = por %p151, %p152
    %p155 = scmp.ne.s32.totalorder %s140, %s154
    %p156 = scmp.eq.s32.totalorder %s25, 0
    %p157 = por %p155, %p156
    %s159 = sadd.s32 %s158, 1
    %p162 = scmp.eq.s32.totalorder %s19, 1
    %p163 = scmp.ne.s32.totalorder %s158, %s160
    %p164 = scmp.eq.s32.totalorder %s19, 0
    %p165 = por %p163, %p164
    %p166 = scmp.ne.s32.totalorder %s158, %s160
    %p167 = scmp.eq.s32.totalorder %s24, 1
    %p168 = por %p166, %p167
    %p169 = scmp.ne.s32.totalorder %s160, %s161
    %p170 = scmp.eq.s32.totalorder %s24, 0
    %p171 = por %p169, %p170
    %p172 = scmp.ne.s32.totalorder %s160, %s161
    %p173 = scmp.eq.s32.totalorder %s25, 1
    %p174 = por %p172, %p173
    %p176 = scmp.ne.s32.totalorder %s161, %s175
    %p177 = scmp.eq.s32.totalorder %s25, 0
    %p178 = por %p176, %p177
    %s180 = sadd.s32 %s179, 1
    %p183 = scmp.eq.s32.totalorder %s19, 1
    %p184 = scmp.ne.s32.totalorder %s179, %s181
    %p185 = scmp.eq.s32.totalorder %s19, 0
    %p186 = por %p184, %p185
    %p187 = scmp.ne.s32.totalorder %s179, %s181
    %p188 = scmp.eq.s32.totalorder %s24, 1
    %p189 = por %p187, %p188
    %p190 = scmp.ne.s32.totalorder %s181, %s182
    %p191 = scmp.eq.s32.totalorder %s24, 0
    %p192 = por %p190, %p191
    %p193 = scmp.ne.s32.totalorder %s181, %s182
    %p194 = scmp.eq.s32.totalorder %s25, 1
    %p195 = por %p193, %p194
    %p197 = scmp.ne.s32.totalorder %s182, %s196
    %p198 = scmp.eq.s32.totalorder %s25, 0
    %p199 = por %p197, %p198
    %s201 = sadd.s32 %s200, 1
    %p204 = scmp.eq.s32.totalorder %s19, 1
    %p205 = scmp.ne.s32.totalorder %s200, %s202
    %p206 = scmp.eq.s32.totalorder %s19, 0
    %p207 = por %p205, %p206
    %p208 = scmp.ne.s32.totalorder %s200, %s202
    %p209 = scmp.eq.s32.totalorder %s24, 1
    %p210 = por %p208, %p209
    %p211 = scmp.ne.s32.totalorder %s202, %s203
    %p212 = scmp.eq.s32.totalorder %s24, 0
    %p213 = por %p211, %p212
    %p214 = scmp.ne.s32.totalorder %s202, %s203
    %p215 = scmp.eq.s32.totalorder %s25, 1
    %p216 = por %p214, %p215
    %p218 = scmp.ne.s32.totalorder %s203, %s217
    %p219 = scmp.eq.s32.totalorder %s25, 0
    %p220 = por %p218, %p219
    %s222 = sadd.s32 %s221, 1
    %p225 = scmp.eq.s32.totalorder %s19, 1
    %p226 = scmp.ne.s32.totalorder %s221, %s223
    %p227 = scmp.eq.s32.totalorder %s19, 0
    %p228 = por %p226, %p227
    %p229 = scmp.ne.s32.totalorder %s221, %s223
    %p230 = scmp.eq.s32.totalorder %s24, 1
    %p231 = por %p229, %p230
    %p232 = scmp.ne.s32.totalorder %s223, %s224
    %p233 = scmp.eq.s32.totalorder %s24, 0
    %p234 = por %p232, %p233
    %p235 = scmp.ne.s32.totalorder %s223, %s224
    %p236 = scmp.eq.s32.totalorder %s25, 1
    %p237 = por %p235, %p236
    %p239 = scmp.ne.s32.totalorder %s224, %s238
    %p240 = scmp.eq.s32.totalorder %s25, 0
    %p241 = por %p239, %p240
    %s243 = sadd.s32 %s242, 1
    %p246 = scmp.eq.s32.totalorder %s19, 1
    %p247 = scmp.ne.s32.totalorder %s242, %s244
    %p248 = scmp.eq.s32.totalorder %s19, 0
    %p249 = por %p247, %p248
    %p250 = scmp.ne.s32.totalorder %s242, %s244
    %p251 = scmp.eq.s32.totalorder %s24, 1
    %p252 = por %p250, %p251
    %p253 = scmp.ne.s32.totalorder %s244, %s245
    %p254 = scmp.eq.s32.totalorder %s24, 0
    %p255 = por %p253, %p254
    %p256 = scmp.ne.s32.totalorder %s244, %s245
    %p257 = scmp.eq.s32.totalorder %s25, 1
    %p258 = por %p256, %p257
    %p260 = scmp.ne.s32.totalorder %s245, %s259
    %p261 = scmp.eq.s32.totalorder %s25, 0
    %p262 = por %p260, %p261
    %s264 = sadd.s32 %s263, 1
    %p267 = scmp.eq.s32.totalorder %s19, 1
    %p268 = scmp.ne.s32.totalorder %s263, %s265
    %p269 = scmp.eq.s32.totalorder %s19, 0
    %p270 = por %p268, %p269
    %p271 = scmp.ne.s32.totalorder %s263, %s265
    %p272 = scmp.eq.s32.totalorder %s24, 1
    %p273 = por %p271, %p272
    %p274 = scmp.ne.s32.totalorder %s265, %s266
    %p275 = scmp.eq.s32.totalorder %s24, 0
    %p276 = por %p274, %p275
    %p277 = scmp.ne.s32.totalorder %s265, %s266
    %p278 = scmp.eq.s32.totalorder %s25, 1
    %p279 = por %p277, %p278
    %p281 = scmp.ne.s32.totalorder %s266, %s280
    %p282 = scmp.eq.s32.totalorder %s25, 0
    %p283 = por %p281, %p282
    %s285 = sadd.s32 %s284, 1
    %p288 = scmp.eq.s32.totalorder %s19, 1
    %p289 = scmp.ne.s32.totalorder %s284, %s286
    %p290 = scmp.eq.s32.totalorder %s19, 0
    %p291 = por %p289, %p290
    %p292 = scmp.ne.s32.totalorder %s284, %s286
    %p293 = scmp.eq.s32.totalorder %s24, 1
    %p294 = por %p292, %p293
    %p295 = scmp.ne.s32.totalorder %s286, %s287
    %p296 = scmp.eq.s32.totalorder %s24, 0
    %p297 = por %p295, %p296
    %p298 = scmp.ne.s32.totalorder %s286, %s287
    %p299 = scmp.eq.s32.totalorder %s25, 1
    %p300 = por %p298, %p299
    %p302 = scmp.ne.s32.totalorder %s287, %s301
    %p303 = scmp.eq.s32.totalorder %s25, 0
    %p304 = por %p302, %p303
    %s305 = ssub.s32 %s19, %s26
    %p306 = scmp.eq.s32.totalorder %s305, 0
    %s308 = sadd.s32 %s307, 1
    %s309 = scalar_select %p306, %s307, %s308
    %p312 = pneg %p306
    %p313 = scmp.eq.s32.totalorder %s19, 1
    %p314 = por %p312, %p313
    %p315 = scmp.ne.s32.totalorder %s307, %s310
    %p316 = scmp.eq.s32.totalorder %s19, 0
    %p317 = por %p315, %p316
    %p318 = scmp.ne.s32.totalorder %s307, %s310
    %p319 = scmp.eq.s32.totalorder %s24, 1
    %p320 = por %p318, %p319
    %p321 = scmp.ne.s32.totalorder %s310, %s311
    %p322 = scmp.eq.s32.totalorder %s24, 0
    %p323 = por %p321, %p322
    %p324 = scmp.ne.s32.totalorder %s310, %s311
    %p325 = scmp.eq.s32.totalorder %s25, 1
    %p326 = por %p324, %p325
    %p328 = scmp.ne.s32.totalorder %s311, %s327
    %p329 = scmp.eq.s32.totalorder %s25, 0
    %p330 = por %p328, %p329
    %p331 = scmp.le.s32.totalorder 1, %s19
    %p332 = scmp.lt.s32.totalorder %s19, 3
    %p333 = pnand %p331, %p332
    %p334 = pneg %p333
    // Predicated region
    $region9: #{anchor_box_predictor_forward.1} parent=5 // pred_check
      _
    $region10: #{anchor_box_predictor_forward.1} parent=5 // pred_check_branch
      %336 = sbr.rel (%p333) target = $region12
    $region11: #{anchor_box_predictor_forward.1} parent=5 // pred_region
      %s337 = ssub.s32 %s19, 1
      // Predicated region
      $region13: #{anchor_box_predictor_forward.1} parent=11 // pred_check
        %p338 = pneg %p66
      $region14: #{anchor_box_predictor_forward.1} parent=11 // pred_check_branch
        %340 = sbr.rel (%p338) target = $region16
      $region15: #{anchor_box_predictor_forward.1} parent=11 // pred_region
        _
      $region16: #{anchor_box_predictor_forward.1} parent=11 // pred_fallthru
        _
      // Predicated region
      $region17: #{anchor_box_predictor_forward.1} parent=11 // pred_check
        %p341 = pneg %p87
      $region18: #{anchor_box_predictor_forward.1} parent=11 // pred_check_branch
        %343 = sbr.rel (%p341) target = $region20
      $region19: #{anchor_box_predictor_forward.1} parent=11 // pred_region
        _
      $region20: #{anchor_box_predictor_forward.1} parent=11 // pred_fallthru
        _
      // Predicated region
      $region21: #{anchor_box_predictor_forward.1} parent=11 // pred_check
        %p344 = pneg %p108
      $region22: #{anchor_box_predictor_forward.1} parent=11 // pred_check_branch
        %346 = sbr.rel (%p344) target = $region24
      $region23: #{anchor_box_predictor_forward.1} parent=11 // pred_region
        _
      $region24: #{anchor_box_predictor_forward.1} parent=11 // pred_fallthru
        _
      // Predicated region
      $region25: #{anchor_box_predictor_forward.1} parent=11 // pred_check
        %p347 = pneg %p129
      $region26: #{anchor_box_predictor_forward.1} parent=11 // pred_check_branch
        %349 = sbr.rel (%p347) target = $region28
      $region27: #{anchor_box_predictor_forward.1} parent=11 // pred_region
        _
      $region28: #{anchor_box_predictor_forward.1} parent=11 // pred_fallthru
        _
      // Predicated region
      $region29: #{anchor_box_predictor_forward.1} parent=11 // pred_check
        %p350 = pneg %p150
      $region30: #{anchor_box_predictor_forward.1} parent=11 // pred_check_branch
        %352 = sbr.rel (%p350) target = $region32
      $region31: #{anchor_box_predictor_forward.1} parent=11 // pred_region
        _
      $region32: #{anchor_box_predictor_forward.1} parent=11 // pred_fallthru
        _
      // Predicated region
      $region33: #{anchor_box_predictor_forward.1} parent=11 // pred_check
        %p353 = pneg %p171
      $region34: #{anchor_box_predictor_forward.1} parent=11 // pred_check_branch
        %355 = sbr.rel (%p353) target = $region36
      $region35: #{anchor_box_predictor_forward.1} parent=11 // pred_region
        _
      $region36: #{anchor_box_predictor_forward.1} parent=11 // pred_fallthru
        _
      // Predicated region
      $region37: #{anchor_box_predictor_forward.1} parent=11 // pred_check
        %p356 = pneg %p192
      $region38: #{anchor_box_predictor_forward.1} parent=11 // pred_check_branch
        %358 = sbr.rel (%p356) target = $region40
      $region39: #{anchor_box_predictor_forward.1} parent=11 // pred_region
        _
      $region40: #{anchor_box_predictor_forward.1} parent=11 // pred_fallthru
        _
      // Predicated region
      $region41: #{anchor_box_predictor_forward.1} parent=11 // pred_check
        %p359 = pneg %p213
      $region42: #{anchor_box_predictor_forward.1} parent=11 // pred_check_branch
        %361 = sbr.rel (%p359) target = $region44
      $region43: #{anchor_box_predictor_forward.1} parent=11 // pred_region
        _
      $region44: #{anchor_box_predictor_forward.1} parent=11 // pred_fallthru
        _
      // Predicated region
      $region45: #{anchor_box_predictor_forward.1} parent=11 // pred_check
        %p362 = pneg %p234
      $region46: #{anchor_box_predictor_forward.1} parent=11 // pred_check_branch
        %364 = sbr.rel (%p362) target = $region48
      $region47: #{anchor_box_predictor_forward.1} parent=11 // pred_region
        _
      $region48: #{anchor_box_predictor_forward.1} parent=11 // pred_fallthru
        _
      // Predicated region
      $region49: #{anchor_box_predictor_forward.1} parent=11 // pred_check
        %p365 = pneg %p255
      $region50: #{anchor_box_predictor_forward.1} parent=11 // pred_check_branch
        %367 = sbr.rel (%p365) target = $region52
      $region51: #{anchor_box_predictor_forward.1} parent=11 // pred_region
        _
      $region52: #{anchor_box_predictor_forward.1} parent=11 // pred_fallthru
        _
      // Predicated region
      $region53: #{anchor_box_predictor_forward.1} parent=11 // pred_check
        %p368 = pneg %p276
      $region54: #{anchor_box_predictor_forward.1} parent=11 // pred_check_branch
        %370 = sbr.rel (%p368) target = $region56
      $region55: #{anchor_box_predictor_forward.1} parent=11 // pred_region
        _
      $region56: #{anchor_box_predictor_forward.1} parent=11 // pred_fallthru
        _
      // Predicated region
      $region57: #{anchor_box_predictor_forward.1} parent=11 // pred_check
        %p371 = pneg %p297
      $region58: #{anchor_box_predictor_forward.1} parent=11 // pred_check_branch
        %373 = sbr.rel (%p371) target = $region60
      $region59: #{anchor_box_predictor_forward.1} parent=11 // pred_region
        _
      $region60: #{anchor_box_predictor_forward.1} parent=11 // pred_fallthru
        _
    $region12: #{anchor_box_predictor_forward.1} parent=5 // pred_fallthru
      _
    %p374 = scmp.lt.s32.totalorder %s19, 2
    // Predicated region
    $region61: #{anchor_box_predictor_forward.1} parent=5 // pred_check
      %p375 = pneg %p374
    $region62: #{anchor_box_predictor_forward.1} parent=5 // pred_check_branch
      %377 = sbr.rel (%p375) target = $region64
    $region63: #{anchor_box_predictor_forward.1} parent=5 // pred_region
      // Predicated region
      $region65: #{anchor_box_predictor_forward.1} parent=63 // pred_check
        %p378 = pneg %p39
      $region66: #{anchor_box_predictor_forward.1} parent=63 // pred_check_branch
        %380 = sbr.rel (%p378) target = $region68
      $region67: #{anchor_box_predictor_forward.1} parent=63 // pred_region
        %p381 = scmp.lt.s32.totalorder %s19, 1
        %s382 = scalar_select %p381, %s19, 1
        %s383 = smul.addr %s382, 8
        %s384 = scalar_lea.vmem %s0, %s383
      $region68: #{anchor_box_predictor_forward.1} parent=63 // pred_fallthru
        _
    $region64: #{anchor_box_predictor_forward.1} parent=5 // pred_fallthru
      _
    %p385 = scmp.le.s32.totalorder 1, %s19
    %p386 = scmp.lt.s32.totalorder %s19, 3
    %p387 = pnand %p385, %p386
    %p388 = pneg %p387
    // Predicated region
    $region69: #{anchor_box_predictor_forward.1} parent=5 // pred_check
      _
    $region70: #{anchor_box_predictor_forward.1} parent=5 // pred_check_branch
      %390 = sbr.rel (%p387) target = $region72
    $region71: #{anchor_box_predictor_forward.1} parent=5 // pred_region
      %s391 = ssub.s32 %s19, 1
      %p392 = scmp.lt.s32.totalorder %s24, 1
      %s393 = scalar_select %p392, %s24, 1
      %s394 = smul.addr %s393, 8
      %s395 = scalar_lea.vmem %s0, %s394
      %p396 = pneg %p45
      %p397 = pneg %p42
      %p398 = pneg %p66
      %p399 = pneg %p63
      %p400 = pneg %p87
      %p401 = pneg %p84
      %p402 = pneg %p108
      %p403 = pneg %p105
      %p404 = pneg %p129
      %p405 = pneg %p126
      %p406 = pneg %p150
      %p407 = pneg %p147
      %p408 = pneg %p171
      %p409 = pneg %p168
      %p410 = pneg %p192
      %p411 = pneg %p189
      %p412 = pneg %p213
      %p413 = pneg %p210
      %p414 = pneg %p234
      %p415 = pneg %p231
      %p416 = pneg %p255
      %p417 = pneg %p252
      %p418 = pneg %p276
      %p419 = pneg %p273
      %p420 = pneg %p297
      %p421 = pneg %p294
      %p422 = pneg %p323
      %p423 = pneg %p320
      %p424 = scmp.lt.s32.totalorder %s24, 1
      %s425 = scalar_select %p424, %s24, 1
      %s426 = smul.addr %s425, 2
      %s427 = smul.addr %s426, 8
      %s428 = scalar_lea.vmem %s13, %s427
      %p429 = scmp.lt.s32.totalorder %s24, 1
      %s430 = scalar_select %p429, %s24, 1
      %s431 = smul.addr %s430, 8
      %s432 = scalar_lea.vmem %s0, %s431
      %p433 = scmp.lt.s32.totalorder %s24, 1
      %s434 = scalar_select %p433, %s24, 1
      %s435 = smul.addr %s434, 2
      %s436 = smul.addr %s435, 8
      %s437 = scalar_lea.vmem %s13, %s436
      %v438 = vld [vmem:[%s432] sm:$0xff]
      %v439 = vld [vmem:[%s1] sm:$0xff]
      %v440 = vld [vmem:[%s1 + $0x8] sm:$0xff]
      %v441 = vld [vmem:[%s1 + $0x10] sm:$0xff]
      %v442 = vld [vmem:[%s1 + $0x18] sm:$0xff]
      %v443 = vld [vmem:[%s1 + $0x20] sm:$0xff]
      %v444 = vld [vmem:[%s1 + $0x28] sm:$0xff]
      %v445 = vld [vmem:[%s1 + $0x30] sm:$0xff]
      %v446 = vld [vmem:[%s1 + $0x38] sm:$0xff]
      %v447 = vld [vmem:[%s1 + $0x40] sm:$0xff]
      %v448 = vld [vmem:[%s1 + $0x48] sm:$0xff]
      %v449 = vld [vmem:[%s1 + $0x50] sm:$0xff]
      %v450 = vld [vmem:[%s1 + $0x58] sm:$0xff]
      %v451 = vld [vmem:[%s1 + $0x60] sm:$0xff]
      %v452 = vld [vmem:[%s1 + $0x68] sm:$0xff]
      %v453 = vld [vmem:[%s1 + $0x70] sm:$0xff]
      %v454 = vld [vmem:[%s1 + $0x78] sm:$0xff]
      %v455 = vld [vmem:[%s1 + $0x80] sm:$0xff]
      %v456 = vld [vmem:[%s1 + $0x88] sm:$0xff]
      %v457 = vld [vmem:[%s1 + $0x90] sm:$0xff]
      %v458 = vld [vmem:[%s1 + $0x98] sm:$0xff]
      %v459 = vld [vmem:[%s1 + $0xa0] sm:$0xff]
      %v460 = vld [vmem:[%s1 + $0xa8] sm:$0xff]
      %v461 = vld [vmem:[%s1 + $0xb0] sm:$0xff]
      %v462 = vld [vmem:[%s1 + $0xb8] sm:$0xff]
      %v463 = vld [vmem:[%s1 + $0xc0] sm:$0xff]
      %v464 = vld [vmem:[%s1 + $0xc8] sm:$0xff]
      %v465 = vld [vmem:[%s1 + $0xd0] sm:$0xff]
      %v466 = vld [vmem:[%s1 + $0xd8] sm:$0xff]
      %v467 = vld [vmem:[%s1 + $0xe0] sm:$0xff]
      %v468 = vld [vmem:[%s1 + $0xe8] sm:$0xff]
      %v469 = vld [vmem:[%s1 + $0xf0] sm:$0xff]
      %v470 = vld [vmem:[%s1 + $0xf8] sm:$0xff]
      %v471 = vld [vmem:[%s1 + $0x100] sm:$0xff]
      %v472 = vld [vmem:[%s1 + $0x108] sm:$0xff]
      %v473 = vld [vmem:[%s1 + $0x110] sm:$0xff]
      %v474 = vld [vmem:[%s1 + $0x118] sm:$0xff]
      %v475 = vld [vmem:[%s1 + $0x120] sm:$0xff]
      %v476 = vld [vmem:[%s1 + $0x128] sm:$0xff]
      %v477 = vld [vmem:[%s1 + $0x130] sm:$0xff]
      %v478 = vld [vmem:[%s1 + $0x138] sm:$0xff]
      %v479 = vld [vmem:[%s1 + $0x140] sm:$0xff]
      %v480 = vld [vmem:[%s1 + $0x148] sm:$0xff]
      %v481 = vld [vmem:[%s1 + $0x150] sm:$0xff]
      %v482 = vld [vmem:[%s1 + $0x158] sm:$0xff]
      %v483 = vld [vmem:[%s1 + $0x160] sm:$0xff]
      %v484 = vld [vmem:[%s1 + $0x168] sm:$0xff]
      %v485 = vld [vmem:[%s1 + $0x170] sm:$0xff]
      %v486 = vld [vmem:[%s1 + $0x178] sm:$0xff]
      %v487 = vld [vmem:[%s1 + $0x180] sm:$0xff]
      %v488 = vld [vmem:[%s1 + $0x188] sm:$0xff]
      %v489 = vld [vmem:[%s1 + $0x190] sm:$0xff]
      %v490 = vld [vmem:[%s1 + $0x198] sm:$0xff]
      %v491 = vld [vmem:[%s1 + $0x1a0] sm:$0xff]
      %v492 = vld [vmem:[%s1 + $0x1a8] sm:$0xff]
      %v493 = vld [vmem:[%s1 + $0x1b0] sm:$0xff]
      %v494 = vld [vmem:[%s1 + $0x1b8] sm:$0xff]
      %v495 = vld [vmem:[%s1 + $0x1c0] sm:$0xff]
      %v496 = vld [vmem:[%s1 + $0x1c8] sm:$0xff]
      %v497 = vld [vmem:[%s1 + $0x1d0] sm:$0xff]
      %v498 = vld [vmem:[%s1 + $0x1d8] sm:$0xff]
      %v499 = vld [vmem:[%s1 + $0x1e0] sm:$0xff]
      %v500 = vld [vmem:[%s1 + $0x1e8] sm:$0xff]
      %v501 = vld [vmem:[%s1 + $0x1f0] sm:$0xff]
      %v502 = vld [vmem:[%s1 + $0x1f8] sm:$0xff]
      %v503 = vld [vmem:[%s1 + $0x200] sm:$0xff]
      %v504 = vld [vmem:[%s1 + $0x208] sm:$0xff]
      %v505 = vld [vmem:[%s1 + $0x210] sm:$0xff]
      %v506 = vld [vmem:[%s1 + $0x218] sm:$0xff]
      %v507 = vld [vmem:[%s1 + $0x220] sm:$0xff]
      %v508 = vld [vmem:[%s1 + $0x228] sm:$0xff]
      %v509 = vld [vmem:[%s1 + $0x230] sm:$0xff]
      %v510 = vld [vmem:[%s1 + $0x238] sm:$0xff]
      %v511 = vld [vmem:[%s1 + $0x240] sm:$0xff]
      %v512 = vld [vmem:[%s1 + $0x248] sm:$0xff]
      %v513 = vld [vmem:[%s1 + $0x250] sm:$0xff]
      %v514 = vld [vmem:[%s1 + $0x258] sm:$0xff]
      %v515 = vld [vmem:[%s1 + $0x260] sm:$0xff]
      %v516 = vld [vmem:[%s1 + $0x268] sm:$0xff]
      %v517 = vld [vmem:[%s1 + $0x270] sm:$0xff]
      %v518 = vld [vmem:[%s1 + $0x278] sm:$0xff]
      %v519 = vld [vmem:[%s1 + $0x280] sm:$0xff]
      %v520 = vld [vmem:[%s1 + $0x288] sm:$0xff]
      %v521 = vld [vmem:[%s1 + $0x290] sm:$0xff]
      %v522 = vld [vmem:[%s1 + $0x298] sm:$0xff]
      %v523 = vld [vmem:[%s1 + $0x2a0] sm:$0xff]
      %v524 = vld [vmem:[%s1 + $0x2a8] sm:$0xff]
      %v525 = vld [vmem:[%s1 + $0x2b0] sm:$0xff]
      %v526 = vld [vmem:[%s1 + $0x2b8] sm:$0xff]
      %v527 = vld [vmem:[%s1 + $0x2c0] sm:$0xff]
      %v528 = vld [vmem:[%s1 + $0x2c8] sm:$0xff]
      %v529 = vld [vmem:[%s1 + $0x2d0] sm:$0xff]
      %v530 = vld [vmem:[%s1 + $0x2d8] sm:$0xff]
      %v531 = vld [vmem:[%s1 + $0x2e0] sm:$0xff]
      %v532 = vld [vmem:[%s1 + $0x2e8] sm:$0xff]
      %v533 = vld [vmem:[%s1 + $0x2f0] sm:$0xff]
      %v534 = vld [vmem:[%s1 + $0x2f8] sm:$0xff]
      %v535 = vld [vmem:[%s1 + $0x300] sm:$0xff]
      %v536 = vld [vmem:[%s1 + $0x308] sm:$0xff]
      %v537 = vld [vmem:[%s1 + $0x310] sm:$0xff]
      %v538 = vld [vmem:[%s1 + $0x318] sm:$0xff]
      %v539 = vld [vmem:[%s1 + $0x320] sm:$0xff]
      %v540 = vld [vmem:[%s1 + $0x328] sm:$0xff]
      %v541 = vld [vmem:[%s1 + $0x330] sm:$0xff]
      %v542 = vld [vmem:[%s1 + $0x338] sm:$0xff]
      %v543 = vld [vmem:[%s1 + $0x340] sm:$0xff]
      %v544 = vld [vmem:[%s1 + $0x348] sm:$0xff]
      %v545 = vld [vmem:[%s1 + $0x350] sm:$0xff]
      %v546 = vld [vmem:[%s1 + $0x358] sm:$0xff]
      %v547 = vld [vmem:[%s1 + $0x360] sm:$0xff]
      %v548 = vld [vmem:[%s1 + $0x368] sm:$0xff]
      %v549 = vld [vmem:[%s1 + $0x370] sm:$0xff]
      %v550 = vld [vmem:[%s1 + $0x378] sm:$0xff]
      %v551 = vld [vmem:[%s1 + $0x380] sm:$0xff]
      %v552 = vld [vmem:[%s1 + $0x388] sm:$0xff]
      %v553 = vld [vmem:[%s1 + $0x390] sm:$0xff]
      %v554 = vld [vmem:[%s1 + $0x398] sm:$0xff]
      %v555 = vld [vmem:[%s1 + $0x3a0] sm:$0xff]
      %v556 = vld [vmem:[%s1 + $0x3a8] sm:$0xff]
      %v557 = vld [vmem:[%s1 + $0x3b0] sm:$0xff]
      %v558 = vld [vmem:[%s1 + $0x3b8] sm:$0xff]
      %v559 = vld [vmem:[%s1 + $0x3c0] sm:$0xff]
      %v560 = vld [vmem:[%s1 + $0x3c8] sm:$0xff]
      %v561 = vld [vmem:[%s1 + $0x3d0] sm:$0xff]
      %v562 = vld [vmem:[%s1 + $0x3d8] sm:$0xff]
      %v563 = vld [vmem:[%s1 + $0x3e0] sm:$0xff]
      %v564 = vld [vmem:[%s1 + $0x3e8] sm:$0xff]
      %v565 = vld [vmem:[%s1 + $0x3f0] sm:$0xff]
      %v566 = vld [vmem:[%s1 + $0x3f8] sm:$0xff]
      %v567 = vld [vmem:[%s1 + $0x400] sm:$0xff]
      %v568 = vld [vmem:[%s1 + $0x408] sm:$0xff]
      %v569 = vld [vmem:[%s1 + $0x410] sm:$0xff]
      %v570 = vld [vmem:[%s1 + $0x418] sm:$0xff]
      %v571 = vld [vmem:[%s1 + $0x420] sm:$0xff]
      %v572 = vld [vmem:[%s1 + $0x428] sm:$0xff]
      %v573 = vld [vmem:[%s1 + $0x430] sm:$0xff]
      %v574 = vld [vmem:[%s1 + $0x438] sm:$0xff]
      %v575 = vld [vmem:[%s1 + $0x440] sm:$0xff]
      %v576 = vld [vmem:[%s1 + $0x448] sm:$0xff]
      %v577 = vld [vmem:[%s1 + $0x450] sm:$0xff]
      %v578 = vld [vmem:[%s1 + $0x458] sm:$0xff]
      %v579 = vld [vmem:[%s1 + $0x460] sm:$0xff]
      %v580 = vld [vmem:[%s1 + $0x468] sm:$0xff]
      %v581 = vld [vmem:[%s1 + $0x470] sm:$0xff]
      %v582 = vld [vmem:[%s1 + $0x478] sm:$0xff]
      %v583 = vld [vmem:[%s1 + $0x480] sm:$0xff]
      %v584 = vld [vmem:[%s1 + $0x488] sm:$0xff]
      %v585 = vld [vmem:[%s1 + $0x490] sm:$0xff]
      %v586 = vld [vmem:[%s1 + $0x498] sm:$0xff]
      %v587 = vld [vmem:[%s1 + $0x4a0] sm:$0xff]
      %v588 = vld [vmem:[%s1 + $0x4a8] sm:$0xff]
      %v589 = vld [vmem:[%s1 + $0x4b0] sm:$0xff]
      %v590 = vld [vmem:[%s1 + $0x4b8] sm:$0xff]
      %v591 = vld [vmem:[%s1 + $0x4c0] sm:$0xff]
      %v592 = vld [vmem:[%s1 + $0x4c8] sm:$0xff]
      %v593 = vld [vmem:[%s1 + $0x4d0] sm:$0xff]
      %v594 = vld [vmem:[%s1 + $0x4d8] sm:$0xff]
      %v595 = vld [vmem:[%s1 + $0x4e0] sm:$0xff]
      %v596 = vld [vmem:[%s1 + $0x4e8] sm:$0xff]
      %v597 = vld [vmem:[%s1 + $0x4f0] sm:$0xff]
      %v598 = vld [vmem:[%s1 + $0x4f8] sm:$0xff]
      %v599 = vld [vmem:[%s1 + $0x500] sm:$0xff]
      %v600 = vld [vmem:[%s1 + $0x508] sm:$0xff]
      %v601 = vld [vmem:[%s1 + $0x510] sm:$0xff]
      %v602 = vld [vmem:[%s1 + $0x518] sm:$0xff]
      %v603 = vld [vmem:[%s1 + $0x520] sm:$0xff]
      %v604 = vld [vmem:[%s1 + $0x528] sm:$0xff]
      %v605 = vld [vmem:[%s1 + $0x530] sm:$0xff]
      %v606 = vld [vmem:[%s1 + $0x538] sm:$0xff]
      %v607 = vld [vmem:[%s1 + $0x540] sm:$0xff]
      %v608 = vld [vmem:[%s1 + $0x548] sm:$0xff]
      %v609 = vld [vmem:[%s1 + $0x550] sm:$0xff]
      %v610 = vld [vmem:[%s1 + $0x558] sm:$0xff]
      %v611 = vld [vmem:[%s1 + $0x560] sm:$0xff]
      %v612 = vld [vmem:[%s1 + $0x568] sm:$0xff]
      %v613 = vld [vmem:[%s1 + $0x570] sm:$0xff]
      %v614 = vld [vmem:[%s1 + $0x578] sm:$0xff]
      %v615 = vld [vmem:[%s1 + $0x580] sm:$0xff]
      %v616 = vld [vmem:[%s1 + $0x588] sm:$0xff]
      %v617 = vld [vmem:[%s1 + $0x590] sm:$0xff]
      %v618 = vld [vmem:[%s1 + $0x598] sm:$0xff]
      %v619 = vld [vmem:[%s1 + $0x5a0] sm:$0xff]
      %v620 = vld [vmem:[%s1 + $0x5a8] sm:$0xff]
      %v621 = vld [vmem:[%s1 + $0x5b0] sm:$0xff]
      %v622 = vld [vmem:[%s1 + $0x5b8] sm:$0xff]
      %v623 = vld [vmem:[%s1 + $0x5c0] sm:$0xff]
      %v624 = vld [vmem:[%s1 + $0x5c8] sm:$0xff]
      %v625 = vld [vmem:[%s1 + $0x5d0] sm:$0xff]
      %v626 = vld [vmem:[%s1 + $0x5d8] sm:$0xff]
      %v627 = vld [vmem:[%s1 + $0x5e0] sm:$0xff]
      %v628 = vld [vmem:[%s1 + $0x5e8] sm:$0xff]
      %v629 = vld [vmem:[%s1 + $0x5f0] sm:$0xff]
      %v630 = vld [vmem:[%s1 + $0x5f8] sm:$0xff]
      %v631 = vld [vmem:[%s1 + $0x600] sm:$0xff]
      %v632 = vld [vmem:[%s1 + $0x608] sm:$0xff]
      %v633 = vld [vmem:[%s1 + $0x610] sm:$0xff]
      %v634 = vld [vmem:[%s1 + $0x618] sm:$0xff]
      %v635 = vld [vmem:[%s1 + $0x620] sm:$0xff]
      %v636 = vld [vmem:[%s1 + $0x628] sm:$0xff]
      %v637 = vld [vmem:[%s1 + $0x630] sm:$0xff]
      %v638 = vld [vmem:[%s1 + $0x638] sm:$0xff]
      %v639 = vld [vmem:[%s1 + $0x640] sm:$0xff]
      %v640 = vld [vmem:[%s1 + $0x648] sm:$0xff]
      %v641 = vld [vmem:[%s1 + $0x650] sm:$0xff]
      %v642 = vld [vmem:[%s1 + $0x658] sm:$0xff]
      %v643 = vld [vmem:[%s1 + $0x660] sm:$0xff]
      %v644 = vld [vmem:[%s1 + $0x668] sm:$0xff]
      %v645 = vld [vmem:[%s1 + $0x670] sm:$0xff]
      %v646 = vld [vmem:[%s1 + $0x678] sm:$0xff]
      %v647 = vld [vmem:[%s1 + $0x680] sm:$0xff]
      %v648 = vld [vmem:[%s1 + $0x688] sm:$0xff]
      %v649 = vld [vmem:[%s1 + $0x690] sm:$0xff]
      %v650 = vld [vmem:[%s1 + $0x698] sm:$0xff]
      %v651 = vld [vmem:[%s1 + $0x6a0] sm:$0xff]
      %v652 = vld [vmem:[%s1 + $0x6a8] sm:$0xff]
      %v653 = vld [vmem:[%s1 + $0x6b0] sm:$0xff]
      %v654 = vld [vmem:[%s1 + $0x6b8] sm:$0xff]
      %v655 = vld [vmem:[%s1 + $0x6c0] sm:$0xff]
      %v656 = vld [vmem:[%s1 + $0x6c8] sm:$0xff]
      %v657 = vld [vmem:[%s1 + $0x6d0] sm:$0xff]
      %v658 = vld [vmem:[%s1 + $0x6d8] sm:$0xff]
      %v659 = vld [vmem:[%s1 + $0x6e0] sm:$0xff]
      %v660 = vld [vmem:[%s1 + $0x6e8] sm:$0xff]
      %v661 = vld [vmem:[%s1 + $0x6f0] sm:$0xff]
      %v662 = vld [vmem:[%s1 + $0x6f8] sm:$0xff]
      %v663 = vld [vmem:[%s1 + $0x700] sm:$0xff]
      %v664 = vld [vmem:[%s1 + $0x708] sm:$0xff]
      %v665 = vld [vmem:[%s1 + $0x710] sm:$0xff]
      %v666 = vld [vmem:[%s1 + $0x718] sm:$0xff]
      %v667 = vld [vmem:[%s1 + $0x720] sm:$0xff]
      %v668 = vld [vmem:[%s1 + $0x728] sm:$0xff]
      %v669 = vld [vmem:[%s1 + $0x730] sm:$0xff]
      %v670 = vld [vmem:[%s1 + $0x738] sm:$0xff]
      %v671 = vld [vmem:[%s1 + $0x740] sm:$0xff]
      %v672 = vld [vmem:[%s1 + $0x748] sm:$0xff]
      %v673 = vld [vmem:[%s1 + $0x750] sm:$0xff]
      %v674 = vld [vmem:[%s1 + $0x758] sm:$0xff]
      %v675 = vld [vmem:[%s1 + $0x760] sm:$0xff]
      %v676 = vld [vmem:[%s1 + $0x768] sm:$0xff]
      %v677 = vld [vmem:[%s1 + $0x770] sm:$0xff]
      %v678 = vld [vmem:[%s1 + $0x778] sm:$0xff]
      %v679 = vld [vmem:[%s1 + $0x780] sm:$0xff]
      %v680 = vld [vmem:[%s1 + $0x788] sm:$0xff]
      %v681 = vld [vmem:[%s1 + $0x790] sm:$0xff]
      %v682 = vld [vmem:[%s1 + $0x798] sm:$0xff]
      %v683 = vld [vmem:[%s1 + $0x7a0] sm:$0xff]
      %v684 = vld [vmem:[%s1 + $0x7a8] sm:$0xff]
      %v685 = vld [vmem:[%s1 + $0x7b0] sm:$0xff]
      %v686 = vld [vmem:[%s1 + $0x7b8] sm:$0xff]
      %v687 = vld [vmem:[%s1 + $0x7c0] sm:$0xff]
      %v688 = vld [vmem:[%s1 + $0x7c8] sm:$0xff]
      %v689 = vld [vmem:[%s1 + $0x7d0] sm:$0xff]
      %v690 = vld [vmem:[%s1 + $0x7d8] sm:$0xff]
      %v691 = vld [vmem:[%s1 + $0x7e0] sm:$0xff]
      %v692 = vld [vmem:[%s1 + $0x7e8] sm:$0xff]
      %v693 = vld [vmem:[%s1 + $0x7f0] sm:$0xff]
      %v694 = vld [vmem:[%s1 + $0x7f8] sm:$0xff]
      %v695 = vld [vmem:[%s1 + $0x800] sm:$0xff]
      %v696 = vld [vmem:[%s1 + $0x808] sm:$0xff]
      %v697 = vld [vmem:[%s1 + $0x810] sm:$0xff]
      %v698 = vld [vmem:[%s1 + $0x818] sm:$0xff]
      %v699 = vld [vmem:[%s1 + $0x820] sm:$0xff]
      %v700 = vld [vmem:[%s1 + $0x828] sm:$0xff]
      %v701 = vld [vmem:[%s1 + $0x830] sm:$0xff]
      %v702 = vld [vmem:[%s1 + $0x838] sm:$0xff]
      %v703 = vld [vmem:[%s1 + $0x840] sm:$0xff]
      %v704 = vld [vmem:[%s1 + $0x848] sm:$0xff]
      %v705 = vld [vmem:[%s1 + $0x850] sm:$0xff]
      %v706 = vld [vmem:[%s1 + $0x858] sm:$0xff]
      %v707 = vld [vmem:[%s1 + $0x860] sm:$0xff]
      %v708 = vld [vmem:[%s1 + $0x868] sm:$0xff]
      %v709 = vld [vmem:[%s1 + $0x870] sm:$0xff]
      %v710 = vld [vmem:[%s1 + $0x878] sm:$0xff]
      %v711 = vld [vmem:[%s1 + $0x880] sm:$0xff]
      %v712 = vld [vmem:[%s1 + $0x888] sm:$0xff]
      %v713 = vld [vmem:[%s1 + $0x890] sm:$0xff]
      %v714 = vld [vmem:[%s1 + $0x898] sm:$0xff]
      %v715 = vld [vmem:[%s1 + $0x8a0] sm:$0xff]
      %v716 = vld [vmem:[%s1 + $0x8a8] sm:$0xff]
      %v717 = vld [vmem:[%s1 + $0x8b0] sm:$0xff]
      %v718 = vld [vmem:[%s1 + $0x8b8] sm:$0xff]
      %v719 = vld [vmem:[%s1 + $0x8c0] sm:$0xff]
      %v720 = vld [vmem:[%s1 + $0x8c8] sm:$0xff]
      %v721 = vld [vmem:[%s1 + $0x8d0] sm:$0xff]
      %v722 = vld [vmem:[%s1 + $0x8d8] sm:$0xff]
      %v723 = vld [vmem:[%s1 + $0x8e0] sm:$0xff]
      %v724 = vld [vmem:[%s1 + $0x8e8] sm:$0xff]
      %v725 = vld [vmem:[%s1 + $0x8f0] sm:$0xff]
      %v726 = vld [vmem:[%s1 + $0x8f8] sm:$0xff]
      %v727 = vld [vmem:[%s1 + $0x900] sm:$0xff]
      %v728 = vld [vmem:[%s1 + $0x908] sm:$0xff]
      %v729 = vld [vmem:[%s1 + $0x910] sm:$0xff]
      %v730 = vld [vmem:[%s1 + $0x918] sm:$0xff]
      %v731 = vld [vmem:[%s1 + $0x920] sm:$0xff]
      %v732 = vld [vmem:[%s1 + $0x928] sm:$0xff]
      %v733 = vld [vmem:[%s1 + $0x930] sm:$0xff]
      %v734 = vld [vmem:[%s1 + $0x938] sm:$0xff]
      %v735 = vld [vmem:[%s1 + $0x940] sm:$0xff]
      %v736 = vld [vmem:[%s1 + $0x948] sm:$0xff]
      %v737 = vld [vmem:[%s1 + $0x950] sm:$0xff]
      %v738 = vld [vmem:[%s1 + $0x958] sm:$0xff]
      %v739 = vld [vmem:[%s1 + $0x960] sm:$0xff]
      %v740 = vld [vmem:[%s1 + $0x968] sm:$0xff]
      %v741 = vld [vmem:[%s1 + $0x970] sm:$0xff]
      %v742 = vld [vmem:[%s1 + $0x978] sm:$0xff]
      %v743 = vld [vmem:[%s1 + $0x980] sm:$0xff]
      %v744 = vld [vmem:[%s1 + $0x988] sm:$0xff]
      %v745 = vld [vmem:[%s1 + $0x990] sm:$0xff]
      %v746 = vld [vmem:[%s1 + $0x998] sm:$0xff]
      %v747 = vld [vmem:[%s1 + $0x9a0] sm:$0xff]
      %v748 = vld [vmem:[%s1 + $0x9a8] sm:$0xff]
      %v749 = vld [vmem:[%s1 + $0x9b0] sm:$0xff]
      %v750 = vld [vmem:[%s1 + $0x9b8] sm:$0xff]
      %v751 = vld [vmem:[%s1 + $0x9c0] sm:$0xff]
      %v752 = vld [vmem:[%s1 + $0x9c8] sm:$0xff]
      %v753 = vld [vmem:[%s1 + $0x9d0] sm:$0xff]
      %v754 = vld [vmem:[%s1 + $0x9d8] sm:$0xff]
      %v755 = vld [vmem:[%s1 + $0x9e0] sm:$0xff]
      %v756 = vld [vmem:[%s1 + $0x9e8] sm:$0xff]
      %v757 = vld [vmem:[%s1 + $0x9f0] sm:$0xff]
      %v758 = vld [vmem:[%s1 + $0x9f8] sm:$0xff]
      %v759 = vld [vmem:[%s1 + $0xa00] sm:$0xff]
      %v760 = vld [vmem:[%s1 + $0xa08] sm:$0xff]
      %v761 = vld [vmem:[%s1 + $0xa10] sm:$0xff]
      %v762 = vld [vmem:[%s1 + $0xa18] sm:$0xff]
      %v763 = vld [vmem:[%s1 + $0xa20] sm:$0xff]
      %v764 = vld [vmem:[%s1 + $0xa28] sm:$0xff]
      %v765 = vld [vmem:[%s1 + $0xa30] sm:$0xff]
      %v766 = vld [vmem:[%s1 + $0xa38] sm:$0xff]
      %v767 = vld [vmem:[%s1 + $0xa40] sm:$0xff]
      %v768 = vld [vmem:[%s1 + $0xa48] sm:$0xff]
      %v769 = vld [vmem:[%s1 + $0xa50] sm:$0xff]
      %v770 = vld [vmem:[%s1 + $0xa58] sm:$0xff]
      %v771 = vld [vmem:[%s1 + $0xa60] sm:$0xff]
      %v772 = vld [vmem:[%s1 + $0xa68] sm:$0xff]
      %v773 = vld [vmem:[%s1 + $0xa70] sm:$0xff]
      %v774 = vld [vmem:[%s1 + $0xa78] sm:$0xff]
      %v775 = vld [vmem:[%s1 + $0xa80] sm:$0xff]
      %v776 = vld [vmem:[%s1 + $0xa88] sm:$0xff]
      %v777 = vld [vmem:[%s1 + $0xa90] sm:$0xff]
      %v778 = vld [vmem:[%s1 + $0xa98] sm:$0xff]
      %v779 = vld [vmem:[%s1 + $0xaa0] sm:$0xff]
      %v780 = vld [vmem:[%s1 + $0xaa8] sm:$0xff]
      %v781 = vld [vmem:[%s1 + $0xab0] sm:$0xff]
      %v782 = vld [vmem:[%s1 + $0xab8] sm:$0xff]
      %v783 = vld [vmem:[%s1 + $0xac0] sm:$0xff]
      %v784 = vld [vmem:[%s1 + $0xac8] sm:$0xff]
      %v785 = vld [vmem:[%s1 + $0xad0] sm:$0xff]
      %v786 = vld [vmem:[%s1 + $0xad8] sm:$0xff]
      %v787 = vld [vmem:[%s1 + $0xae0] sm:$0xff]
      %v788 = vld [vmem:[%s1 + $0xae8] sm:$0xff]
      %v789 = vld [vmem:[%s1 + $0xaf0] sm:$0xff]
      %v790 = vld [vmem:[%s1 + $0xaf8] sm:$0xff]
      %v791 = vld [vmem:[%s1 + $0xb00] sm:$0xff]
      %v792 = vld [vmem:[%s1 + $0xb08] sm:$0xff]
      %v793 = vld [vmem:[%s1 + $0xb10] sm:$0xff]
      %v794 = vld [vmem:[%s1 + $0xb18] sm:$0xff]
      %v795 = vld [vmem:[%s1 + $0xb20] sm:$0xff]
      %v796 = vld [vmem:[%s1 + $0xb28] sm:$0xff]
      %v797 = vld [vmem:[%s1 + $0xb30] sm:$0xff]
      %v798 = vld [vmem:[%s1 + $0xb38] sm:$0xff]
      %v799 = vld [vmem:[%s1 + $0xb40] sm:$0xff]
      %v800 = vld [vmem:[%s1 + $0xb48] sm:$0xff]
      %v801 = vld [vmem:[%s1 + $0xb50] sm:$0xff]
      %v802 = vld [vmem:[%s1 + $0xb58] sm:$0xff]
      %v803 = vld [vmem:[%s1 + $0xb60] sm:$0xff]
      %v804 = vld [vmem:[%s1 + $0xb68] sm:$0xff]
      %v805 = vld [vmem:[%s1 + $0xb70] sm:$0xff]
      %v806 = vld [vmem:[%s1 + $0xb78] sm:$0xff]
      %v807 = vld [vmem:[%s1 + $0xb80] sm:$0xff]
      %v808 = vld [vmem:[%s1 + $0xb88] sm:$0xff]
      %v809 = vld [vmem:[%s1 + $0xb90] sm:$0xff]
      %v810 = vld [vmem:[%s1 + $0xb98] sm:$0xff]
      %v811 = vld [vmem:[%s1 + $0xba0] sm:$0xff]
      %v812 = vld [vmem:[%s1 + $0xba8] sm:$0xff]
      %v813 = vld [vmem:[%s1 + $0xbb0] sm:$0xff]
      %v814 = vld [vmem:[%s1 + $0xbb8] sm:$0xff]
      %v815 = vld [vmem:[%s1 + $0xbc0] sm:$0xff]
      %v816 = vld [vmem:[%s1 + $0xbc8] sm:$0xff]
      %v817 = vld [vmem:[%s1 + $0xbd0] sm:$0xff]
      %v818 = vld [vmem:[%s1 + $0xbd8] sm:$0xff]
      %v819 = vld [vmem:[%s1 + $0xbe0] sm:$0xff]
      %v820 = vld [vmem:[%s1 + $0xbe8] sm:$0xff]
      %v821 = vld [vmem:[%s1 + $0xbf0] sm:$0xff]
      %v822 = vld [vmem:[%s1 + $0xbf8] sm:$0xff]
      %v823 = vld [vmem:[%s1 + $0xc00] sm:$0xff]
      %v824 = vld [vmem:[%s1 + $0xc08] sm:$0xff]
      %v825 = vld [vmem:[%s1 + $0xc10] sm:$0xff]
      %v826 = vld [vmem:[%s1 + $0xc18] sm:$0xff]
      %v827 = vld [vmem:[%s1 + $0xc20] sm:$0xff]
      %v828 = vld [vmem:[%s1 + $0xc28] sm:$0xff]
      %v829 = vld [vmem:[%s1 + $0xc30] sm:$0xff]
      %v830 = vld [vmem:[%s1 + $0xc38] sm:$0xff]
      %v831 = vld [vmem:[%s1 + $0xc40] sm:$0xff]
      %v832 = vld [vmem:[%s1 + $0xc48] sm:$0xff]
      %v833 = vld [vmem:[%s1 + $0xc50] sm:$0xff]
      %v834 = vld [vmem:[%s1 + $0xc58] sm:$0xff]
      %v835 = vld [vmem:[%s1 + $0xc60] sm:$0xff]
      %v836 = vld [vmem:[%s1 + $0xc68] sm:$0xff]
      %v837 = vld [vmem:[%s1 + $0xc70] sm:$0xff]
      %v838 = vld [vmem:[%s1 + $0xc78] sm:$0xff]
      %v839 = vld [vmem:[%s1 + $0xc80] sm:$0xff]
      %v840 = vld [vmem:[%s1 + $0xc88] sm:$0xff]
      %v841 = vld [vmem:[%s1 + $0xc90] sm:$0xff]
      %v842 = vld [vmem:[%s1 + $0xc98] sm:$0xff]
      %v843 = vld [vmem:[%s1 + $0xca0] sm:$0xff]
      %v844 = vld [vmem:[%s1 + $0xca8] sm:$0xff]
      %v845 = vld [vmem:[%s1 + $0xcb0] sm:$0xff]
      %v846 = vld [vmem:[%s1 + $0xcb8] sm:$0xff]
      %v847 = vld [vmem:[%s1 + $0xcc0] sm:$0xff]
      %v848 = vld [vmem:[%s1 + $0xcc8] sm:$0xff]
      %v849 = vld [vmem:[%s1 + $0xcd0] sm:$0xff]
      %v850 = vld [vmem:[%s1 + $0xcd8] sm:$0xff]
      %v851 = vld [vmem:[%s1 + $0xce0] sm:$0xff]
      %v852 = vld [vmem:[%s1 + $0xce8] sm:$0xff]
      %v853 = vld [vmem:[%s1 + $0xcf0] sm:$0xff]
      %v854 = vld [vmem:[%s1 + $0xcf8] sm:$0xff]
      %v855 = vld [vmem:[%s1 + $0xd00] sm:$0xff]
      %v856 = vld [vmem:[%s1 + $0xd08] sm:$0xff]
      %v857 = vld [vmem:[%s1 + $0xd10] sm:$0xff]
      %v858 = vld [vmem:[%s1 + $0xd18] sm:$0xff]
      %v859 = vld [vmem:[%s1 + $0xd20] sm:$0xff]
      %v860 = vld [vmem:[%s1 + $0xd28] sm:$0xff]
      %v861 = vld [vmem:[%s1 + $0xd30] sm:$0xff]
      %v862 = vld [vmem:[%s1 + $0xd38] sm:$0xff]
      %v863 = vld [vmem:[%s1 + $0xd40] sm:$0xff]
      %v864 = vld [vmem:[%s1 + $0xd48] sm:$0xff]
      %v865 = vld [vmem:[%s1 + $0xd50] sm:$0xff]
      %v866 = vld [vmem:[%s1 + $0xd58] sm:$0xff]
      %v867 = vld [vmem:[%s1 + $0xd60] sm:$0xff]
      %v868 = vld [vmem:[%s1 + $0xd68] sm:$0xff]
      %v869 = vld [vmem:[%s1 + $0xd70] sm:$0xff]
      %v870 = vld [vmem:[%s1 + $0xd78] sm:$0xff]
      %v871 = vld [vmem:[%s1 + $0xd80] sm:$0xff]
      %v872 = vld [vmem:[%s1 + $0xd88] sm:$0xff]
      %v873 = vld [vmem:[%s1 + $0xd90] sm:$0xff]
      %v874 = vld [vmem:[%s1 + $0xd98] sm:$0xff]
      %v875 = vld [vmem:[%s1 + $0xda0] sm:$0xff]
      %v876 = vld [vmem:[%s1 + $0xda8] sm:$0xff]
      %v877 = vld [vmem:[%s1 + $0xdb0] sm:$0xff]
      %v878 = vld [vmem:[%s1 + $0xdb8] sm:$0xff]
      %v879 = vld [vmem:[%s1 + $0xdc0] sm:$0xff]
      %v880 = vld [vmem:[%s1 + $0xdc8] sm:$0xff]
      %v881 = vld [vmem:[%s1 + $0xdd0] sm:$0xff]
      %v882 = vld [vmem:[%s1 + $0xdd8] sm:$0xff]
      %v883 = vld [vmem:[%s1 + $0xde0] sm:$0xff]
      %v884 = vld [vmem:[%s1 + $0xde8] sm:$0xff]
      %v885 = vld [vmem:[%s1 + $0xdf0] sm:$0xff]
      %v886 = vld [vmem:[%s1 + $0xdf8] sm:$0xff]
      %v887 = vld [vmem:[%s1 + $0xe00] sm:$0xff]
      %v888 = vld [vmem:[%s1 + $0xe08] sm:$0xff]
      %v889 = vld [vmem:[%s1 + $0xe10] sm:$0xff]
      %v890 = vld [vmem:[%s1 + $0xe18] sm:$0xff]
      %v891 = vld [vmem:[%s1 + $0xe20] sm:$0xff]
      %v892 = vld [vmem:[%s1 + $0xe28] sm:$0xff]
      %v893 = vld [vmem:[%s1 + $0xe30] sm:$0xff]
      %v894 = vld [vmem:[%s1 + $0xe38] sm:$0xff]
      %v895 = vld [vmem:[%s1 + $0xe40] sm:$0xff]
      %v896 = vld [vmem:[%s1 + $0xe48] sm:$0xff]
      %v897 = vld [vmem:[%s1 + $0xe50] sm:$0xff]
      %v898 = vld [vmem:[%s1 + $0xe58] sm:$0xff]
      %v899 = vld [vmem:[%s1 + $0xe60] sm:$0xff]
      %v900 = vld [vmem:[%s1 + $0xe68] sm:$0xff]
      %v901 = vld [vmem:[%s1 + $0xe70] sm:$0xff]
      %v902 = vld [vmem:[%s1 + $0xe78] sm:$0xff]
      %v903 = vld [vmem:[%s1 + $0xe80] sm:$0xff]
      %v904 = vld [vmem:[%s1 + $0xe88] sm:$0xff]
      %v905 = vld [vmem:[%s1 + $0xe90] sm:$0xff]
      %v906 = vld [vmem:[%s1 + $0xe98] sm:$0xff]
      %v907 = vld [vmem:[%s1 + $0xea0] sm:$0xff]
      %v908 = vld [vmem:[%s1 + $0xea8] sm:$0xff]
      %v909 = vld [vmem:[%s1 + $0xeb0] sm:$0xff]
      %v910 = vld [vmem:[%s1 + $0xeb8] sm:$0xff]
      %v911 = vld [vmem:[%s1 + $0xec0] sm:$0xff]
      %v912 = vld [vmem:[%s1 + $0xec8] sm:$0xff]
      %v913 = vld [vmem:[%s1 + $0xed0] sm:$0xff]
      %v914 = vld [vmem:[%s1 + $0xed8] sm:$0xff]
      %v915 = vld [vmem:[%s1 + $0xee0] sm:$0xff]
      %v916 = vld [vmem:[%s1 + $0xee8] sm:$0xff]
      %v917 = vld [vmem:[%s1 + $0xef0] sm:$0xff]
      %v918 = vld [vmem:[%s1 + $0xef8] sm:$0xff]
      %v919 = vld [vmem:[%s1 + $0xf00] sm:$0xff]
      %v920 = vld [vmem:[%s1 + $0xf08] sm:$0xff]
      %v921 = vld [vmem:[%s1 + $0xf10] sm:$0xff]
      %v922 = vld [vmem:[%s1 + $0xf18] sm:$0xff]
      %v923 = vld [vmem:[%s1 + $0xf20] sm:$0xff]
      %v924 = vld [vmem:[%s1 + $0xf28] sm:$0xff]
      %v925 = vld [vmem:[%s1 + $0xf30] sm:$0xff]
      %v926 = vld [vmem:[%s1 + $0xf38] sm:$0xff]
      %v927 = vld [vmem:[%s1 + $0xf40] sm:$0xff]
      %v928 = vld [vmem:[%s1 + $0xf48] sm:$0xff]
      %v929 = vld [vmem:[%s1 + $0xf50] sm:$0xff]
      %v930 = vld [vmem:[%s1 + $0xf58] sm:$0xff]
      %v931 = vld [vmem:[%s1 + $0xf60] sm:$0xff]
      %v932 = vld [vmem:[%s1 + $0xf68] sm:$0xff]
      %v933 = vld [vmem:[%s1 + $0xf70] sm:$0xff]
      %v934 = vld [vmem:[%s1 + $0xf78] sm:$0xff]
      %v935 = vld [vmem:[%s1 + $0xf80] sm:$0xff]
      %v936 = vld [vmem:[%s1 + $0xf88] sm:$0xff]
      %v937 = vld [vmem:[%s1 + $0xf90] sm:$0xff]
      %v938 = vld [vmem:[%s1 + $0xf98] sm:$0xff]
      %v939 = vld [vmem:[%s1 + $0xfa0] sm:$0xff]
      %v940 = vld [vmem:[%s1 + $0xfa8] sm:$0xff]
      %v941 = vld [vmem:[%s1 + $0xfb0] sm:$0xff]
      %v942 = vld [vmem:[%s1 + $0xfb8] sm:$0xff]
      %v943 = vld [vmem:[%s1 + $0xfc0] sm:$0xff]
      %v944 = vld [vmem:[%s1 + $0xfc8] sm:$0xff]
      %v945 = vld [vmem:[%s1 + $0xfd0] sm:$0xff]
      %v946 = vld [vmem:[%s1 + $0xfd8] sm:$0xff]
      %v947 = vld [vmem:[%s1 + $0xfe0] sm:$0xff]
      %v948 = vld [vmem:[%s1 + $0xfe8] sm:$0xff]
      %v949 = vld [vmem:[%s1 + $0xff0] sm:$0xff]
      %v950 = vld [vmem:[%s1 + $0xff8] sm:$0xff]
      %v951 = vld [vmem:[%s2] sm:$0xf]
      %v953 = vlaneseq
      %v954 = vshrl.u32 %v953, 7
      %v955 = vsub.s32 0, %v954
      %v956 = vrot.slane %v438, %v955
      %v957 = vlaneseq
      %v958 = vshrl.u32 %v957, 7
      %v959 = vsub.s32 1, %v958
      %v960 = vrot.slane %v438, %v959
      %v961 = vlaneseq
      %v962 = vshrl.u32 %v961, 7
      %v963 = vsub.s32 2, %v962
      %v964 = vrot.slane %v438, %v963
      %v965 = vlaneseq
      %v966 = vshrl.u32 %v965, 7
      %v967 = vsub.s32 3, %v966
      %v968 = vrot.slane %v438, %v967
      %v969 = vlaneseq
      %v970 = vshrl.u32 %v969, 7
      %v971 = vsub.s32 4, %v970
      %v972 = vrot.slane %v438, %v971
      %v973 = vlaneseq
      %v974 = vshrl.u32 %v973, 7
      %v975 = vsub.s32 5, %v974
      %v976 = vrot.slane %v438, %v975
      %v977 = vlaneseq
      %v978 = vshrl.u32 %v977, 7
      %v979 = vsub.s32 6, %v978
      %v980 = vrot.slane %v438, %v979
      %v981 = vlaneseq
      %v982 = vshrl.u32 %v981, 7
      %v983 = vsub.s32 7, %v982
      %v984 = vrot.slane %v438, %v983
      %v994 = vlaneseq
      %v995 = vshrl.u32 %v994, 7
      %v996 = vsub.s32 0, %v995
      %v997 = vrot.slane %v951, %v996
      %v998 = vlaneseq
      %v999 = vshrl.u32 %v998, 7
      %v1000 = vsub.s32 1, %v999
      %v1001 = vrot.slane %v951, %v1000
      %v1002 = vlaneseq
      %v1003 = vshrl.u32 %v1002, 7
      %v1004 = vsub.s32 2, %v1003
      %v1005 = vrot.slane %v951, %v1004
      %v1006 = vlaneseq
      %v1007 = vshrl.u32 %v1006, 7
      %v1008 = vsub.s32 3, %v1007
      %v1009 = vrot.slane %v951, %v1008
      %1014 = vmatprep.subr.mxu0 %v500
      %1015 = vmatpush1.msra.mxu0 %v499
      %1016 = vmatprep.subr.mxu0 %v496
      %1017 = vmatpush1.msra.mxu0 %v495
      %1018 = vmatprep.subr.mxu0 %v492
      %1019 = vmatpush1.msra.mxu0 %v491
      %1020 = vmatprep.subr.mxu0 %v488
      %1021 = vmatpush1.msra.mxu0 %v487
      %1022 = vmatprep.subr.mxu0 %v484
      %1023 = vmatpush1.msra.mxu0 %v483
      %1024 = vmatprep.subr.mxu0 %v480
      %1025 = vmatpush1.msra.mxu0 %v479
      %1026 = vmatprep.subr.mxu0 %v476
      %1027 = vmatpush1.msra.mxu0 %v475
      %1028 = vmatprep.subr.mxu0 %v472
      %1029 = vmatpush1.msra.mxu0 %v471
      %1030 = vmatprep.subr.mxu0 %v468
      %1031 = vmatpush1.msra.mxu0 %v467
      %1032 = vmatprep.subr.mxu0 %v464
      %1033 = vmatpush1.msra.mxu0 %v463
      %1034 = vmatprep.subr.mxu0 %v460
      %1035 = vmatpush1.msra.mxu0 %v459
      %1036 = vmatprep.subr.mxu0 %v456
      %1037 = vmatpush1.msra.mxu0 %v455
      %1038 = vmatprep.subr.mxu0 %v452
      %1039 = vmatpush1.msra.mxu0 %v451
      %1040 = vmatprep.subr.mxu0 %v448
      %1041 = vmatpush1.msra.mxu0 %v447
      %1042 = vmatprep.subr.mxu0 %v444
      %1043 = vmatpush1.msra.mxu0 %v443
      %1044 = vmatprep.subr.mxu0 %v440
      %1045 = vmatpush1.msra.mxu0 %v439
      %1046 = vmatprep.subr.mxu0 %v564
      %1047 = vmatpush2.msra.mxu0 %v563
      %1048 = vmatprep.subr.mxu0 %v560
      %1049 = vmatpush2.msra.mxu0 %v559
      %1050 = vmatprep.subr.mxu0 %v556
      %1051 = vmatpush2.msra.mxu0 %v555
      %1052 = vmatprep.subr.mxu0 %v552
      %1053 = vmatpush2.msra.mxu0 %v551
      %1054 = vmatprep.subr.mxu0 %v548
      %1055 = vmatpush2.msra.mxu0 %v547
      %1056 = vmatprep.subr.mxu0 %v544
      %1057 = vmatpush2.msra.mxu0 %v543
      %1058 = vmatprep.subr.mxu0 %v540
      %1059 = vmatpush2.msra.mxu0 %v539
      %1060 = vmatprep.subr.mxu0 %v536
      %1061 = vmatpush2.msra.mxu0 %v535
      %1062 = vmatprep.subr.mxu0 %v532
      %1063 = vmatpush2.msra.mxu0 %v531
      %1064 = vmatprep.subr.mxu0 %v528
      %1065 = vmatpush2.msra.mxu0 %v527
      %1066 = vmatprep.subr.mxu0 %v524
      %1067 = vmatpush2.msra.mxu0 %v523
      %1068 = vmatprep.subr.mxu0 %v520
      %1069 = vmatpush2.msra.mxu0 %v519
      %1070 = vmatprep.subr.mxu0 %v516
      %1071 = vmatpush2.msra.mxu0 %v515
      %1072 = vmatprep.subr.mxu0 %v512
      %1073 = vmatpush2.msra.mxu0 %v511
      %1074 = vmatprep.subr.mxu0 %v508
      %1075 = vmatpush2.msra.mxu0 %v507
      %1076 = vmatprep.subr.mxu0 %v504
      %1077 = vmatpush2.msra.mxu0 %v503
      %1078 = vmatprep.mubr.f32.mxu0 %v960
      %1079 = vmatmul.mubr.f32.gmra.mxu0 %v956
      %v1080 = vpop.f32.mrf.mxu0
      %v1081 = vadd.f32 %v997, %v1080
      %v1082 = vpop.f32.mrf.mxu0
      %v1083 = vadd.f32 %v1001, %v1082
      %1084 = vdwg.mxu0
      %1085 = vmatprep.subr.mxu0 %v628
      %1086 = vmatpush1.msra.mxu0 %v627
      %1087 = vmatprep.subr.mxu0 %v624
      %1088 = vmatpush1.msra.mxu0 %v623
      %1089 = vmatprep.subr.mxu0 %v620
      %1090 = vmatpush1.msra.mxu0 %v619
      %1091 = vmatprep.subr.mxu0 %v616
      %1092 = vmatpush1.msra.mxu0 %v615
      %1093 = vmatprep.subr.mxu0 %v612
      %1094 = vmatpush1.msra.mxu0 %v611
      %1095 = vmatprep.subr.mxu0 %v608
      %1096 = vmatpush1.msra.mxu0 %v607
      %1097 = vmatprep.subr.mxu0 %v604
      %1098 = vmatpush1.msra.mxu0 %v603
      %1099 = vmatprep.subr.mxu0 %v600
      %1100 = vmatpush1.msra.mxu0 %v599
      %1101 = vmatprep.subr.mxu0 %v596
      %1102 = vmatpush1.msra.mxu0 %v595
      %1103 = vmatprep.subr.mxu0 %v592
      %1104 = vmatpush1.msra.mxu0 %v591
      %1105 = vmatprep.subr.mxu0 %v588
      %1106 = vmatpush1.msra.mxu0 %v587
      %1107 = vmatprep.subr.mxu0 %v584
      %1108 = vmatpush1.msra.mxu0 %v583
      %1109 = vmatprep.subr.mxu0 %v580
      %1110 = vmatpush1.msra.mxu0 %v579
      %1111 = vmatprep.subr.mxu0 %v576
      %1112 = vmatpush1.msra.mxu0 %v575
      %1113 = vmatprep.subr.mxu0 %v572
      %1114 = vmatpush1.msra.mxu0 %v571
      %1115 = vmatprep.subr.mxu0 %v568
      %1116 = vmatpush1.msra.mxu0 %v567
      %1117 = vmatprep.subr.mxu0 %v692
      %1118 = vmatpush2.msra.mxu0 %v691
      %1119 = vmatprep.subr.mxu0 %v688
      %1120 = vmatpush2.msra.mxu0 %v687
      %1121 = vmatprep.subr.mxu0 %v684
      %1122 = vmatpush2.msra.mxu0 %v683
      %1123 = vmatprep.subr.mxu0 %v680
      %1124 = vmatpush2.msra.mxu0 %v679
      %1125 = vmatprep.subr.mxu0 %v676
      %1126 = vmatpush2.msra.mxu0 %v675
      %1127 = vmatprep.subr.mxu0 %v672
      %1128 = vmatpush2.msra.mxu0 %v671
      %1129 = vmatprep.subr.mxu0 %v668
      %1130 = vmatpush2.msra.mxu0 %v667
      %1131 = vmatprep.subr.mxu0 %v664
      %1132 = vmatpush2.msra.mxu0 %v663
      %1133 = vmatprep.subr.mxu0 %v660
      %1134 = vmatpush2.msra.mxu0 %v659
      %1135 = vmatprep.subr.mxu0 %v656
      %1136 = vmatpush2.msra.mxu0 %v655
      %1137 = vmatprep.subr.mxu0 %v652
      %1138 = vmatpush2.msra.mxu0 %v651
      %1139 = vmatprep.subr.mxu0 %v648
      %1140 = vmatpush2.msra.mxu0 %v647
      %1141 = vmatprep.subr.mxu0 %v644
      %1142 = vmatpush2.msra.mxu0 %v643
      %1143 = vmatprep.subr.mxu0 %v640
      %1144 = vmatpush2.msra.mxu0 %v639
      %1145 = vmatprep.subr.mxu0 %v636
      %1146 = vmatpush2.msra.mxu0 %v635
      %1147 = vmatprep.subr.mxu0 %v632
      %1148 = vmatpush2.msra.mxu0 %v631
      %1149 = vmatprep.mubr.f32.mxu0 %v968
      %1150 = vmatmul.mubr.f32.gmra.mxu0 %v964
      %v1151 = vpop.f32.mrf.mxu0
      %v1152 = vadd.f32 %v1081, %v1151
      %v1153 = vpop.f32.mrf.mxu0
      %v1154 = vadd.f32 %v1083, %v1153
      %1155 = vdwg.mxu0
      %1156 = vmatprep.subr.mxu0 %v756
      %1157 = vmatpush1.msra.mxu0 %v755
      %1158 = vmatprep.subr.mxu0 %v752
      %1159 = vmatpush1.msra.mxu0 %v751
      %1160 = vmatprep.subr.mxu0 %v748
      %1161 = vmatpush1.msra.mxu0 %v747
      %1162 = vmatprep.subr.mxu0 %v744
      %1163 = vmatpush1.msra.mxu0 %v743
      %1164 = vmatprep.subr.mxu0 %v740
      %1165 = vmatpush1.msra.mxu0 %v739
      %1166 = vmatprep.subr.mxu0 %v736
      %1167 = vmatpush1.msra.mxu0 %v735
      %1168 = vmatprep.subr.mxu0 %v732
      %1169 = vmatpush1.msra.mxu0 %v731
      %1170 = vmatprep.subr.mxu0 %v728
      %1171 = vmatpush1.msra.mxu0 %v727
      %1172 = vmatprep.subr.mxu0 %v724
      %1173 = vmatpush1.msra.mxu0 %v723
      %1174 = vmatprep.subr.mxu0 %v720
      %1175 = vmatpush1.msra.mxu0 %v719
      %1176 = vmatprep.subr.mxu0 %v716
      %1177 = vmatpush1.msra.mxu0 %v715
      %1178 = vmatprep.subr.mxu0 %v712
      %1179 = vmatpush1.msra.mxu0 %v711
      %1180 = vmatprep.subr.mxu0 %v708
      %1181 = vmatpush1.msra.mxu0 %v707
      %1182 = vmatprep.subr.mxu0 %v704
      %1183 = vmatpush1.msra.mxu0 %v703
      %1184 = vmatprep.subr.mxu0 %v700
      %1185 = vmatpush1.msra.mxu0 %v699
      %1186 = vmatprep.subr.mxu0 %v696
      %1187 = vmatpush1.msra.mxu0 %v695
      %1188 = vmatprep.subr.mxu0 %v820
      %1189 = vmatpush2.msra.mxu0 %v819
      %1190 = vmatprep.subr.mxu0 %v816
      %1191 = vmatpush2.msra.mxu0 %v815
      %1192 = vmatprep.subr.mxu0 %v812
      %1193 = vmatpush2.msra.mxu0 %v811
      %1194 = vmatprep.subr.mxu0 %v808
      %1195 = vmatpush2.msra.mxu0 %v807
      %1196 = vmatprep.subr.mxu0 %v804
      %1197 = vmatpush2.msra.mxu0 %v803
      %1198 = vmatprep.subr.mxu0 %v800
      %1199 = vmatpush2.msra.mxu0 %v799
      %1200 = vmatprep.subr.mxu0 %v796
      %1201 = vmatpush2.msra.mxu0 %v795
      %1202 = vmatprep.subr.mxu0 %v792
      %1203 = vmatpush2.msra.mxu0 %v791
      %1204 = vmatprep.subr.mxu0 %v788
      %1205 = vmatpush2.msra.mxu0 %v787
      %1206 = vmatprep.subr.mxu0 %v784
      %1207 = vmatpush2.msra.mxu0 %v783
      %1208 = vmatprep.subr.mxu0 %v780
      %1209 = vmatpush2.msra.mxu0 %v779
      %1210 = vmatprep.subr.mxu0 %v776
      %1211 = vmatpush2.msra.mxu0 %v775
      %1212 = vmatprep.subr.mxu0 %v772
      %1213 = vmatpush2.msra.mxu0 %v771
      %1214 = vmatprep.subr.mxu0 %v768
      %1215 = vmatpush2.msra.mxu0 %v767
      %1216 = vmatprep.subr.mxu0 %v764
      %1217 = vmatpush2.msra.mxu0 %v763
      %1218 = vmatprep.subr.mxu0 %v760
      %1219 = vmatpush2.msra.mxu0 %v759
      %1220 = vmatprep.mubr.f32.mxu0 %v976
      %1221 = vmatmul.mubr.f32.gmra.mxu0 %v972
      %v1222 = vpop.f32.mrf.mxu0
      %v1223 = vadd.f32 %v1152, %v1222
      %v1224 = vpop.f32.mrf.mxu0
      %v1225 = vadd.f32 %v1154, %v1224
      %1226 = vdwg.mxu0
      %1227 = vmatprep.subr.mxu0 %v884
      %1228 = vmatpush1.msra.mxu0 %v883
      %1229 = vmatprep.subr.mxu0 %v880
      %1230 = vmatpush1.msra.mxu0 %v879
      %1231 = vmatprep.subr.mxu0 %v876
      %1232 = vmatpush1.msra.mxu0 %v875
      %1233 = vmatprep.subr.mxu0 %v872
      %1234 = vmatpush1.msra.mxu0 %v871
      %1235 = vmatprep.subr.mxu0 %v868
      %1236 = vmatpush1.msra.mxu0 %v867
      %1237 = vmatprep.subr.mxu0 %v864
      %1238 = vmatpush1.msra.mxu0 %v863
      %1239 = vmatprep.subr.mxu0 %v860
      %1240 = vmatpush1.msra.mxu0 %v859
      %1241 = vmatprep.subr.mxu0 %v856
      %1242 = vmatpush1.msra.mxu0 %v855
      %1243 = vmatprep.subr.mxu0 %v852
      %1244 = vmatpush1.msra.mxu0 %v851
      %1245 = vmatprep.subr.mxu0 %v848
      %1246 = vmatpush1.msra.mxu0 %v847
      %1247 = vmatprep.subr.mxu0 %v844
      %1248 = vmatpush1.msra.mxu0 %v843
      %1249 = vmatprep.subr.mxu0 %v840
      %1250 = vmatpush1.msra.mxu0 %v839
      %1251 = vmatprep.subr.mxu0 %v836
      %1252 = vmatpush1.msra.mxu0 %v835
      %1253 = vmatprep.subr.mxu0 %v832
      %1254 = vmatpush1.msra.mxu0 %v831
      %1255 = vmatprep.subr.mxu0 %v828
      %1256 = vmatpush1.msra.mxu0 %v827
      %1257 = vmatprep.subr.mxu0 %v824
      %1258 = vmatpush1.msra.mxu0 %v823
      %1259 = vmatprep.subr.mxu0 %v948
      %1260 = vmatpush2.msra.mxu0 %v947
      %1261 = vmatprep.subr.mxu0 %v944
      %1262 = vmatpush2.msra.mxu0 %v943
      %1263 = vmatprep.subr.mxu0 %v940
      %1264 = vmatpush2.msra.mxu0 %v939
      %1265 = vmatprep.subr.mxu0 %v936
      %1266 = vmatpush2.msra.mxu0 %v935
      %1267 = vmatprep.subr.mxu0 %v932
      %1268 = vmatpush2.msra.mxu0 %v931
      %1269 = vmatprep.subr.mxu0 %v928
      %1270 = vmatpush2.msra.mxu0 %v927
      %1271 = vmatprep.subr.mxu0 %v924
      %1272 = vmatpush2.msra.mxu0 %v923
      %1273 = vmatprep.subr.mxu0 %v920
      %1274 = vmatpush2.msra.mxu0 %v919
      %1275 = vmatprep.subr.mxu0 %v916
      %1276 = vmatpush2.msra.mxu0 %v915
      %1277 = vmatprep.subr.mxu0 %v912
      %1278 = vmatpush2.msra.mxu0 %v911
      %1279 = vmatprep.subr.mxu0 %v908
      %1280 = vmatpush2.msra.mxu0 %v907
      %1281 = vmatprep.subr.mxu0 %v904
      %1282 = vmatpush2.msra.mxu0 %v903
      %1283 = vmatprep.subr.mxu0 %v900
      %1284 = vmatpush2.msra.mxu0 %v899
      %1285 = vmatprep.subr.mxu0 %v896
      %1286 = vmatpush2.msra.mxu0 %v895
      %1287 = vmatprep.subr.mxu0 %v892
      %1288 = vmatpush2.msra.mxu0 %v891
      %1289 = vmatprep.subr.mxu0 %v888
      %1290 = vmatpush2.msra.mxu0 %v887
      %1291 = vmatprep.mubr.f32.mxu0 %v984
      %1292 = vmatmul.mubr.f32.gmra.mxu0 %v980
      %v1293 = vpop.f32.mrf.mxu0
      %v1294 = vadd.f32 %v1223, %v1293
      %v1295 = vpop.f32.mrf.mxu0
      %v1296 = vadd.f32 %v1225, %v1295
      %1297 = vdwg.mxu0
      %1298 = vmatprep.subr.mxu0 %v502
      %1299 = vmatpush1.msra.mxu0 %v501
      %1300 = vmatprep.subr.mxu0 %v498
      %1301 = vmatpush1.msra.mxu0 %v497
      %1302 = vmatprep.subr.mxu0 %v494
      %1303 = vmatpush1.msra.mxu0 %v493
      %1304 = vmatprep.subr.mxu0 %v490
      %1305 = vmatpush1.msra.mxu0 %v489
      %1306 = vmatprep.subr.mxu0 %v486
      %1307 = vmatpush1.msra.mxu0 %v485
      %1308 = vmatprep.subr.mxu0 %v482
      %1309 = vmatpush1.msra.mxu0 %v481
      %1310 = vmatprep.subr.mxu0 %v478
      %1311 = vmatpush1.msra.mxu0 %v477
      %1312 = vmatprep.subr.mxu0 %v474
      %1313 = vmatpush1.msra.mxu0 %v473
      %1314 = vmatprep.subr.mxu0 %v470
      %1315 = vmatpush1.msra.mxu0 %v469
      %1316 = vmatprep.subr.mxu0 %v466
      %1317 = vmatpush1.msra.mxu0 %v465
      %1318 = vmatprep.subr.mxu0 %v462
      %1319 = vmatpush1.msra.mxu0 %v461
      %1320 = vmatprep.subr.mxu0 %v458
      %1321 = vmatpush1.msra.mxu0 %v457
      %1322 = vmatprep.subr.mxu0 %v454
      %1323 = vmatpush1.msra.mxu0 %v453
      %1324 = vmatprep.subr.mxu0 %v450
      %1325 = vmatpush1.msra.mxu0 %v449
      %1326 = vmatprep.subr.mxu0 %v446
      %1327 = vmatpush1.msra.mxu0 %v445
      %1328 = vmatprep.subr.mxu0 %v442
      %1329 = vmatpush1.msra.mxu0 %v441
      %1330 = vmatprep.subr.mxu0 %v566
      %1331 = vmatpush2.msra.mxu0 %v565
      %1332 = vmatprep.subr.mxu0 %v562
      %1333 = vmatpush2.msra.mxu0 %v561
      %1334 = vmatprep.subr.mxu0 %v558
      %1335 = vmatpush2.msra.mxu0 %v557
      %1336 = vmatprep.subr.mxu0 %v554
      %1337 = vmatpush2.msra.mxu0 %v553
      %1338 = vmatprep.subr.mxu0 %v550
      %1339 = vmatpush2.msra.mxu0 %v549
      %1340 = vmatprep.subr.mxu0 %v546
      %1341 = vmatpush2.msra.mxu0 %v545
      %1342 = vmatprep.subr.mxu0 %v542
      %1343 = vmatpush2.msra.mxu0 %v541
      %1344 = vmatprep.subr.mxu0 %v538
      %1345 = vmatpush2.msra.mxu0 %v537
      %1346 = vmatprep.subr.mxu0 %v534
      %1347 = vmatpush2.msra.mxu0 %v533
      %1348 = vmatprep.subr.mxu0 %v530
      %1349 = vmatpush2.msra.mxu0 %v529
      %1350 = vmatprep.subr.mxu0 %v526
      %1351 = vmatpush2.msra.mxu0 %v525
      %1352 = vmatprep.subr.mxu0 %v522
      %1353 = vmatpush2.msra.mxu0 %v521
      %1354 = vmatprep.subr.mxu0 %v518
      %1355 = vmatpush2.msra.mxu0 %v517
      %1356 = vmatprep.subr.mxu0 %v514
      %1357 = vmatpush2.msra.mxu0 %v513
      %1358 = vmatprep.subr.mxu0 %v510
      %1359 = vmatpush2.msra.mxu0 %v509
      %1360 = vmatprep.subr.mxu0 %v506
      %1361 = vmatpush2.msra.mxu0 %v505
      %1362 = vmatprep.mubr.f32.mxu0 %v960
      %1363 = vmatmul.mubr.f32.gmra.mxu0 %v956
      %v1364 = vpop.f32.mrf.mxu0
      %v1365 = vadd.f32 %v1005, %v1364
      %v1366 = vpop.f32.mrf.mxu0
      %v1367 = vadd.f32 %v1009, %v1366
      %1368 = vdwg.mxu0
      %1369 = vmatprep.subr.mxu0 %v630
      %1370 = vmatpush1.msra.mxu0 %v629
      %1371 = vmatprep.subr.mxu0 %v626
      %1372 = vmatpush1.msra.mxu0 %v625
      %1373 = vmatprep.subr.mxu0 %v622
      %1374 = vmatpush1.msra.mxu0 %v621
      %1375 = vmatprep.subr.mxu0 %v618
      %1376 = vmatpush1.msra.mxu0 %v617
      %1377 = vmatprep.subr.mxu0 %v614
      %1378 = vmatpush1.msra.mxu0 %v613
      %1379 = vmatprep.subr.mxu0 %v610
      %1380 = vmatpush1.msra.mxu0 %v609
      %1381 = vmatprep.subr.mxu0 %v606
      %1382 = vmatpush1.msra.mxu0 %v605
      %1383 = vmatprep.subr.mxu0 %v602
      %1384 = vmatpush1.msra.mxu0 %v601
      %1385 = vmatprep.subr.mxu0 %v598
      %1386 = vmatpush1.msra.mxu0 %v597
      %1387 = vmatprep.subr.mxu0 %v594
      %1388 = vmatpush1.msra.mxu0 %v593
      %1389 = vmatprep.subr.mxu0 %v590
      %1390 = vmatpush1.msra.mxu0 %v589
      %1391 = vmatprep.subr.mxu0 %v586
      %1392 = vmatpush1.msra.mxu0 %v585
      %1393 = vmatprep.subr.mxu0 %v582
      %1394 = vmatpush1.msra.mxu0 %v581
      %1395 = vmatprep.subr.mxu0 %v578
      %1396 = vmatpush1.msra.mxu0 %v577
      %1397 = vmatprep.subr.mxu0 %v574
      %1398 = vmatpush1.msra.mxu0 %v573
      %1399 = vmatprep.subr.mxu0 %v570
      %1400 = vmatpush1.msra.mxu0 %v569
      %1401 = vmatprep.subr.mxu0 %v694
      %1402 = vmatpush2.msra.mxu0 %v693
      %1403 = vmatprep.subr.mxu0 %v690
      %1404 = vmatpush2.msra.mxu0 %v689
      %1405 = vmatprep.subr.mxu0 %v686
      %1406 = vmatpush2.msra.mxu0 %v685
      %1407 = vmatprep.subr.mxu0 %v682
      %1408 = vmatpush2.msra.mxu0 %v681
      %1409 = vmatprep.subr.mxu0 %v678
      %1410 = vmatpush2.msra.mxu0 %v677
      %1411 = vmatprep.subr.mxu0 %v674
      %1412 = vmatpush2.msra.mxu0 %v673
      %1413 = vmatprep.subr.mxu0 %v670
      %1414 = vmatpush2.msra.mxu0 %v669
      %1415 = vmatprep.subr.mxu0 %v666
      %1416 = vmatpush2.msra.mxu0 %v665
      %1417 = vmatprep.subr.mxu0 %v662
      %1418 = vmatpush2.msra.mxu0 %v661
      %1419 = vmatprep.subr.mxu0 %v658
      %1420 = vmatpush2.msra.mxu0 %v657
      %1421 = vmatprep.subr.mxu0 %v654
      %1422 = vmatpush2.msra.mxu0 %v653
      %1423 = vmatprep.subr.mxu0 %v650
      %1424 = vmatpush2.msra.mxu0 %v649
      %1425 = vmatprep.subr.mxu0 %v646
      %1426 = vmatpush2.msra.mxu0 %v645
      %1427 = vmatprep.subr.mxu0 %v642
      %1428 = vmatpush2.msra.mxu0 %v641
      %1429 = vmatprep.subr.mxu0 %v638
      %1430 = vmatpush2.msra.mxu0 %v637
      %1431 = vmatprep.subr.mxu0 %v634
      %1432 = vmatpush2.msra.mxu0 %v633
      %1433 = vmatprep.mubr.f32.mxu0 %v968
      %1434 = vmatmul.mubr.f32.gmra.mxu0 %v964
      %v1435 = vpop.f32.mrf.mxu0
      %v1436 = vadd.f32 %v1365, %v1435
      %v1437 = vpop.f32.mrf.mxu0
      %v1438 = vadd.f32 %v1367, %v1437
      %1439 = vdwg.mxu0
      %1440 = vmatprep.subr.mxu0 %v758
      %1441 = vmatpush1.msra.mxu0 %v757
      %1442 = vmatprep.subr.mxu0 %v754
      %1443 = vmatpush1.msra.mxu0 %v753
      %1444 = vmatprep.subr.mxu0 %v750
      %1445 = vmatpush1.msra.mxu0 %v749
      %1446 = vmatprep.subr.mxu0 %v746
      %1447 = vmatpush1.msra.mxu0 %v745
      %1448 = vmatprep.subr.mxu0 %v742
      %1449 = vmatpush1.msra.mxu0 %v741
      %1450 = vmatprep.subr.mxu0 %v738
      %1451 = vmatpush1.msra.mxu0 %v737
      %1452 = vmatprep.subr.mxu0 %v734
      %1453 = vmatpush1.msra.mxu0 %v733
      %1454 = vmatprep.subr.mxu0 %v730
      %1455 = vmatpush1.msra.mxu0 %v729
      %1456 = vmatprep.subr.mxu0 %v726
      %1457 = vmatpush1.msra.mxu0 %v725
      %1458 = vmatprep.subr.mxu0 %v722
      %1459 = vmatpush1.msra.mxu0 %v721
      %1460 = vmatprep.subr.mxu0 %v718
      %1461 = vmatpush1.msra.mxu0 %v717
      %1462 = vmatprep.subr.mxu0 %v714
      %1463 = vmatpush1.msra.mxu0 %v713
      %1464 = vmatprep.subr.mxu0 %v710
      %1465 = vmatpush1.msra.mxu0 %v709
      %1466 = vmatprep.subr.mxu0 %v706
      %1467 = vmatpush1.msra.mxu0 %v705
      %1468 = vmatprep.subr.mxu0 %v702
      %1469 = vmatpush1.msra.mxu0 %v701
      %1470 = vmatprep.subr.mxu0 %v698
      %1471 = vmatpush1.msra.mxu0 %v697
      %1472 = vmatprep.subr.mxu0 %v822
      %1473 = vmatpush2.msra.mxu0 %v821
      %1474 = vmatprep.subr.mxu0 %v818
      %1475 = vmatpush2.msra.mxu0 %v817
      %1476 = vmatprep.subr.mxu0 %v814
      %1477 = vmatpush2.msra.mxu0 %v813
      %1478 = vmatprep.subr.mxu0 %v810
      %1479 = vmatpush2.msra.mxu0 %v809
      %1480 = vmatprep.subr.mxu0 %v806
      %1481 = vmatpush2.msra.mxu0 %v805
      %1482 = vmatprep.subr.mxu0 %v802
      %1483 = vmatpush2.msra.mxu0 %v801
      %1484 = vmatprep.subr.mxu0 %v798
      %1485 = vmatpush2.msra.mxu0 %v797
      %1486 = vmatprep.subr.mxu0 %v794
      %1487 = vmatpush2.msra.mxu0 %v793
      %1488 = vmatprep.subr.mxu0 %v790
      %1489 = vmatpush2.msra.mxu0 %v789
      %1490 = vmatprep.subr.mxu0 %v786
      %1491 = vmatpush2.msra.mxu0 %v785
      %1492 = vmatprep.subr.mxu0 %v782
      %1493 = vmatpush2.msra.mxu0 %v781
      %1494 = vmatprep.subr.mxu0 %v778
      %1495 = vmatpush2.msra.mxu0 %v777
      %1496 = vmatprep.subr.mxu0 %v774
      %1497 = vmatpush2.msra.mxu0 %v773
      %1498 = vmatprep.subr.mxu0 %v770
      %1499 = vmatpush2.msra.mxu0 %v769
      %1500 = vmatprep.subr.mxu0 %v766
      %1501 = vmatpush2.msra.mxu0 %v765
      %1502 = vmatprep.subr.mxu0 %v762
      %1503 = vmatpush2.msra.mxu0 %v761
      %1504 = vmatprep.mubr.f32.mxu0 %v976
      %1505 = vmatmul.mubr.f32.gmra.mxu0 %v972
      %v1506 = vpop.f32.mrf.mxu0
      %v1507 = vadd.f32 %v1436, %v1506
      %v1508 = vpop.f32.mrf.mxu0
      %v1509 = vadd.f32 %v1438, %v1508
      %1510 = vdwg.mxu0
      %1511 = vmatprep.subr.mxu0 %v886
      %1512 = vmatpush1.msra.mxu0 %v885
      %1513 = vmatprep.subr.mxu0 %v882
      %1514 = vmatpush1.msra.mxu0 %v881
      %1515 = vmatprep.subr.mxu0 %v878
      %1516 = vmatpush1.msra.mxu0 %v877
      %1517 = vmatprep.subr.mxu0 %v874
      %1518 = vmatpush1.msra.mxu0 %v873
      %1519 = vmatprep.subr.mxu0 %v870
      %1520 = vmatpush1.msra.mxu0 %v869
      %1521 = vmatprep.subr.mxu0 %v866
      %1522 = vmatpush1.msra.mxu0 %v865
      %1523 = vmatprep.subr.mxu0 %v862
      %1524 = vmatpush1.msra.mxu0 %v861
      %1525 = vmatprep.subr.mxu0 %v858
      %1526 = vmatpush1.msra.mxu0 %v857
      %1527 = vmatprep.subr.mxu0 %v854
      %1528 = vmatpush1.msra.mxu0 %v853
      %1529 = vmatprep.subr.mxu0 %v850
      %1530 = vmatpush1.msra.mxu0 %v849
      %1531 = vmatprep.subr.mxu0 %v846
      %1532 = vmatpush1.msra.mxu0 %v845
      %1533 = vmatprep.subr.mxu0 %v842
      %1534 = vmatpush1.msra.mxu0 %v841
      %1535 = vmatprep.subr.mxu0 %v838
      %1536 = vmatpush1.msra.mxu0 %v837
      %1537 = vmatprep.subr.mxu0 %v834
      %1538 = vmatpush1.msra.mxu0 %v833
      %1539 = vmatprep.subr.mxu0 %v830
      %1540 = vmatpush1.msra.mxu0 %v829
      %1541 = vmatprep.subr.mxu0 %v826
      %1542 = vmatpush1.msra.mxu0 %v825
      %1543 = vmatprep.subr.mxu0 %v950
      %1544 = vmatpush2.msra.mxu0 %v949
      %1545 = vmatprep.subr.mxu0 %v946
      %1546 = vmatpush2.msra.mxu0 %v945
      %1547 = vmatprep.subr.mxu0 %v942
      %1548 = vmatpush2.msra.mxu0 %v941
      %1549 = vmatprep.subr.mxu0 %v938
      %1550 = vmatpush2.msra.mxu0 %v937
      %1551 = vmatprep.subr.mxu0 %v934
      %1552 = vmatpush2.msra.mxu0 %v933
      %1553 = vmatprep.subr.mxu0 %v930
      %1554 = vmatpush2.msra.mxu0 %v929
      %1555 = vmatprep.subr.mxu0 %v926
      %1556 = vmatpush2.msra.mxu0 %v925
      %1557 = vmatprep.subr.mxu0 %v922
      %1558 = vmatpush2.msra.mxu0 %v921
      %1559 = vmatprep.subr.mxu0 %v918
      %1560 = vmatpush2.msra.mxu0 %v917
      %1561 = vmatprep.subr.mxu0 %v914
      %1562 = vmatpush2.msra.mxu0 %v913
      %1563 = vmatprep.subr.mxu0 %v910
      %1564 = vmatpush2.msra.mxu0 %v909
      %1565 = vmatprep.subr.mxu0 %v906
      %1566 = vmatpush2.msra.mxu0 %v905
      %1567 = vmatprep.subr.mxu0 %v902
      %1568 = vmatpush2.msra.mxu0 %v901
      %1569 = vmatprep.subr.mxu0 %v898
      %1570 = vmatpush2.msra.mxu0 %v897
      %1571 = vmatprep.subr.mxu0 %v894
      %1572 = vmatpush2.msra.mxu0 %v893
      %1573 = vmatprep.subr.mxu0 %v890
      %1574 = vmatpush2.msra.mxu0 %v889
      %1575 = vmatprep.mubr.f32.mxu0 %v984
      %1576 = vmatmul.mubr.f32.gmra.mxu0 %v980
      %v1577 = vpop.f32.mrf.mxu0
      %v1578 = vadd.f32 %v1507, %v1577
      %v1579 = vpop.f32.mrf.mxu0
      %v1580 = vadd.f32 %v1509, %v1579
      %1581 = vdwg.mxu0
      %v1582 = vmax.f32 %v1294, 0.0
      %v1583 = vmax.f32 %v1296, 0.0
      %v1584 = vmax.f32 %v1578, 0.0
      %v1585 = vmax.f32 %v1580, 0.0
      %v1586 = vld [vmem:[%s3] sm:$0xff]
      %v1587 = vld [vmem:[%s3 + $0x8] sm:$0xff]
      %v1588 = vld [vmem:[%s3 + $0x10] sm:$0xff]
      %v1589 = vld [vmem:[%s3 + $0x18] sm:$0xff]
      %v1590 = vld [vmem:[%s3 + $0x20] sm:$0xff]
      %v1591 = vld [vmem:[%s3 + $0x28] sm:$0xff]
      %v1592 = vld [vmem:[%s3 + $0x30] sm:$0xff]
      %v1593 = vld [vmem:[%s3 + $0x38] sm:$0xff]
      %v1594 = vld [vmem:[%s3 + $0x40] sm:$0xff]
      %v1595 = vld [vmem:[%s3 + $0x48] sm:$0xff]
      %v1596 = vld [vmem:[%s3 + $0x50] sm:$0xff]
      %v1597 = vld [vmem:[%s3 + $0x58] sm:$0xff]
      %v1598 = vld [vmem:[%s3 + $0x60] sm:$0xff]
      %v1599 = vld [vmem:[%s3 + $0x68] sm:$0xff]
      %v1600 = vld [vmem:[%s3 + $0x70] sm:$0xff]
      %v1601 = vld [vmem:[%s3 + $0x78] sm:$0xff]
      %v1602 = vld [vmem:[%s3 + $0x80] sm:$0xff]
      %v1603 = vld [vmem:[%s3 + $0x88] sm:$0xff]
      %v1604 = vld [vmem:[%s3 + $0x90] sm:$0xff]
      %v1605 = vld [vmem:[%s3 + $0x98] sm:$0xff]
      %v1606 = vld [vmem:[%s3 + $0xa0] sm:$0xff]
      %v1607 = vld [vmem:[%s3 + $0xa8] sm:$0xff]
      %v1608 = vld [vmem:[%s3 + $0xb0] sm:$0xff]
      %v1609 = vld [vmem:[%s3 + $0xb8] sm:$0xff]
      %v1610 = vld [vmem:[%s3 + $0xc0] sm:$0xff]
      %v1611 = vld [vmem:[%s3 + $0xc8] sm:$0xff]
      %v1612 = vld [vmem:[%s3 + $0xd0] sm:$0xff]
      %v1613 = vld [vmem:[%s3 + $0xd8] sm:$0xff]
      %v1614 = vld [vmem:[%s3 + $0xe0] sm:$0xff]
      %v1615 = vld [vmem:[%s3 + $0xe8] sm:$0xff]
      %v1616 = vld [vmem:[%s3 + $0xf0] sm:$0xff]
      %v1617 = vld [vmem:[%s3 + $0xf8] sm:$0xff]
      %v1618 = vld [vmem:[%s3 + $0x100] sm:$0xff]
      %v1619 = vld [vmem:[%s3 + $0x108] sm:$0xff]
      %v1620 = vld [vmem:[%s3 + $0x110] sm:$0xff]
      %v1621 = vld [vmem:[%s3 + $0x118] sm:$0xff]
      %v1622 = vld [vmem:[%s3 + $0x120] sm:$0xff]
      %v1623 = vld [vmem:[%s3 + $0x128] sm:$0xff]
      %v1624 = vld [vmem:[%s3 + $0x130] sm:$0xff]
      %v1625 = vld [vmem:[%s3 + $0x138] sm:$0xff]
      %v1626 = vld [vmem:[%s3 + $0x140] sm:$0xff]
      %v1627 = vld [vmem:[%s3 + $0x148] sm:$0xff]
      %v1628 = vld [vmem:[%s3 + $0x150] sm:$0xff]
      %v1629 = vld [vmem:[%s3 + $0x158] sm:$0xff]
      %v1630 = vld [vmem:[%s3 + $0x160] sm:$0xff]
      %v1631 = vld [vmem:[%s3 + $0x168] sm:$0xff]
      %v1632 = vld [vmem:[%s3 + $0x170] sm:$0xff]
      %v1633 = vld [vmem:[%s3 + $0x178] sm:$0xff]
      %v1634 = vld [vmem:[%s3 + $0x180] sm:$0xff]
      %v1635 = vld [vmem:[%s3 + $0x188] sm:$0xff]
      %v1636 = vld [vmem:[%s3 + $0x190] sm:$0xff]
      %v1637 = vld [vmem:[%s3 + $0x198] sm:$0xff]
      %v1638 = vld [vmem:[%s3 + $0x1a0] sm:$0xff]
      %v1639 = vld [vmem:[%s3 + $0x1a8] sm:$0xff]
      %v1640 = vld [vmem:[%s4] sm:$0x1]
      %vm1641 = vcmask 392192
      %v1643 = vsel %vm1641, %v1585, 0
      %1645 = vmatprep.subr.mxu0 0.0
      %1646 = vmatpush1.msra.mxu0 %v1601
      %1647 = vmatprep.subr.mxu0 0.0
      %1648 = vmatpush1.msra.mxu0 %v1600
      %1649 = vmatprep.subr.mxu0 0.0
      %1650 = vmatpush1.msra.mxu0 %v1599
      %1651 = vmatprep.subr.mxu0 0.0
      %1652 = vmatpush1.msra.mxu0 %v1598
      %1653 = vmatprep.subr.mxu0 0.0
      %1654 = vmatpush1.msra.mxu0 %v1597
      %1655 = vmatprep.subr.mxu0 0.0
      %1656 = vmatpush1.msra.mxu0 %v1596
      %1657 = vmatprep.subr.mxu0 0.0
      %1658 = vmatpush1.msra.mxu0 %v1595
      %1659 = vmatprep.subr.mxu0 0.0
      %1660 = vmatpush1.msra.mxu0 %v1594
      %1661 = vmatprep.subr.mxu0 0.0
      %1662 = vmatpush1.msra.mxu0 %v1593
      %1663 = vmatprep.subr.mxu0 0.0
      %1664 = vmatpush1.msra.mxu0 %v1592
      %1665 = vmatprep.subr.mxu0 0.0
      %1666 = vmatpush1.msra.mxu0 %v1591
      %1667 = vmatprep.subr.mxu0 0.0
      %1668 = vmatpush1.msra.mxu0 %v1590
      %1669 = vmatprep.subr.mxu0 0.0
      %1670 = vmatpush1.msra.mxu0 %v1589
      %1671 = vmatprep.subr.mxu0 0.0
      %1672 = vmatpush1.msra.mxu0 %v1588
      %1673 = vmatprep.subr.mxu0 0.0
      %1674 = vmatpush1.msra.mxu0 %v1587
      %1675 = vmatprep.subr.mxu0 0.0
      %1676 = vmatpush1.msra.mxu0 %v1586
      %1677 = vmatprep.subr.mxu0 0.0
      %1678 = vmatpush2.msra.mxu0 %v1617
      %1679 = vmatprep.subr.mxu0 0.0
      %1680 = vmatpush2.msra.mxu0 %v1616
      %1681 = vmatprep.subr.mxu0 0.0
      %1682 = vmatpush2.msra.mxu0 %v1615
      %1683 = vmatprep.subr.mxu0 0.0
      %1684 = vmatpush2.msra.mxu0 %v1614
      %1685 = vmatprep.subr.mxu0 0.0
      %1686 = vmatpush2.msra.mxu0 %v1613
      %1687 = vmatprep.subr.mxu0 0.0
      %1688 = vmatpush2.msra.mxu0 %v1612
      %1689 = vmatprep.subr.mxu0 0.0
      %1690 = vmatpush2.msra.mxu0 %v1611
      %1691 = vmatprep.subr.mxu0 0.0
      %1692 = vmatpush2.msra.mxu0 %v1610
      %1693 = vmatprep.subr.mxu0 0.0
      %1694 = vmatpush2.msra.mxu0 %v1609
      %1695 = vmatprep.subr.mxu0 0.0
      %1696 = vmatpush2.msra.mxu0 %v1608
      %1697 = vmatprep.subr.mxu0 0.0
      %1698 = vmatpush2.msra.mxu0 %v1607
      %1699 = vmatprep.subr.mxu0 0.0
      %1700 = vmatpush2.msra.mxu0 %v1606
      %1701 = vmatprep.subr.mxu0 0.0
      %1702 = vmatpush2.msra.mxu0 %v1605
      %1703 = vmatprep.subr.mxu0 0.0
      %1704 = vmatpush2.msra.mxu0 %v1604
      %1705 = vmatprep.subr.mxu0 0.0
      %1706 = vmatpush2.msra.mxu0 %v1603
      %1707 = vmatprep.subr.mxu0 0.0
      %1708 = vmatpush2.msra.mxu0 %v1602
      %1709 = vmatprep.mubr.f32.mxu0 %v1583
      %1710 = vmatmul.mubr.f32.gmra.mxu0 %v1582
      %v1711 = vpop.f32.mrf.mxu0
      %v1712 = vadd.f32 %v1640, %v1711
      %v1713 = vpop.f32.mrf.mxu0
      %1714 = vdwg.mxu0
      %1715 = vmatprep.subr.mxu0 0.0
      %1716 = vmatpush1.msra.mxu0 %v1633
      %1717 = vmatprep.subr.mxu0 0.0
      %1718 = vmatpush1.msra.mxu0 %v1632
      %1719 = vmatprep.subr.mxu0 0.0
      %1720 = vmatpush1.msra.mxu0 %v1631
      %1721 = vmatprep.subr.mxu0 0.0
      %1722 = vmatpush1.msra.mxu0 %v1630
      %1723 = vmatprep.subr.mxu0 0.0
      %1724 = vmatpush1.msra.mxu0 %v1629
      %1725 = vmatprep.subr.mxu0 0.0
      %1726 = vmatpush1.msra.mxu0 %v1628
      %1727 = vmatprep.subr.mxu0 0.0
      %1728 = vmatpush1.msra.mxu0 %v1627
      %1729 = vmatprep.subr.mxu0 0.0
      %1730 = vmatpush1.msra.mxu0 %v1626
      %1731 = vmatprep.subr.mxu0 0.0
      %1732 = vmatpush1.msra.mxu0 %v1625
      %1733 = vmatprep.subr.mxu0 0.0
      %1734 = vmatpush1.msra.mxu0 %v1624
      %1735 = vmatprep.subr.mxu0 0.0
      %1736 = vmatpush1.msra.mxu0 %v1623
      %1737 = vmatprep.subr.mxu0 0.0
      %1738 = vmatpush1.msra.mxu0 %v1622
      %1739 = vmatprep.subr.mxu0 0.0
      %1740 = vmatpush1.msra.mxu0 %v1621
      %1741 = vmatprep.subr.mxu0 0.0
      %1742 = vmatpush1.msra.mxu0 %v1620
      %1743 = vmatprep.subr.mxu0 0.0
      %1744 = vmatpush1.msra.mxu0 %v1619
      %1745 = vmatprep.subr.mxu0 0.0
      %1746 = vmatpush1.msra.mxu0 %v1618
      %1747 = vmatprep.subr.mxu0 0.0
      %1748 = vmatpush2.msra.mxu0 0.0
      %1749 = vmatprep.subr.mxu0 0.0
      %1750 = vmatpush2.msra.mxu0 0.0
      %1751 = vmatprep.subr.mxu0 0.0
      %1752 = vmatpush2.msra.mxu0 0.0
      %1753 = vmatprep.subr.mxu0 0.0
      %1754 = vmatpush2.msra.mxu0 0.0
      %1755 = vmatprep.subr.mxu0 0.0
      %1756 = vmatpush2.msra.mxu0 0.0
      %1757 = vmatprep.subr.mxu0 0.0
      %1758 = vmatpush2.msra.mxu0 0.0
      %1759 = vmatprep.subr.mxu0 0.0
      %1760 = vmatpush2.msra.mxu0 0.0
      %1761 = vmatprep.subr.mxu0 0.0
      %1762 = vmatpush2.msra.mxu0 0.0
      %1763 = vmatprep.subr.mxu0 0.0
      %1764 = vmatpush2.msra.mxu0 0.0
      %1765 = vmatprep.subr.mxu0 0.0
      %1766 = vmatpush2.msra.mxu0 0.0
      %1767 = vmatprep.subr.mxu0 0.0
      %1768 = vmatpush2.msra.mxu0 %v1639
      %1769 = vmatprep.subr.mxu0 0.0
      %1770 = vmatpush2.msra.mxu0 %v1638
      %1771 = vmatprep.subr.mxu0 0.0
      %1772 = vmatpush2.msra.mxu0 %v1637
      %1773 = vmatprep.subr.mxu0 0.0
      %1774 = vmatpush2.msra.mxu0 %v1636
      %1775 = vmatprep.subr.mxu0 0.0
      %1776 = vmatpush2.msra.mxu0 %v1635
      %1777 = vmatprep.subr.mxu0 0.0
      %1778 = vmatpush2.msra.mxu0 %v1634
      %1779 = vmatprep.mubr.f32.mxu0 %v1643
      %1780 = vmatmul.mubr.f32.gmra.mxu0 %v1584
      %v1781 = vpop.f32.mrf.mxu0
      %v1782 = vadd.f32 %v1712, %v1781
      %v1783 = vpop.f32.mrf.mxu0
      %1784 = vdwg.mxu0
      %v1785 = vmax.f32 %v1782, 0.0
      %v1786 = vld [vmem:[%s5] sm:$0xff]
      %v1787 = vld [vmem:[%s5 + $0x8] sm:$0xff]
      %v1788 = vld [vmem:[%s5 + $0x10] sm:$0xff]
      %v1789 = vld [vmem:[%s5 + $0x18] sm:$0xff]
      %v1790 = vld [vmem:[%s5 + $0x20] sm:$0xff]
      %v1791 = vld [vmem:[%s5 + $0x28] sm:$0xff]
      %v1792 = vld [vmem:[%s5 + $0x30] sm:$0xff]
      %v1793 = vld [vmem:[%s5 + $0x38] sm:$0xff]
      %v1794 = vld [vmem:[%s5 + $0x40] sm:$0xff]
      %v1795 = vld [vmem:[%s5 + $0x48] sm:$0xff]
      %v1796 = vld [vmem:[%s5 + $0x50] sm:$0xff]
      %v1797 = vld [vmem:[%s5 + $0x58] sm:$0xff]
      %v1798 = vld [vmem:[%s5 + $0x60] sm:$0xff]
      %v1799 = vld [vmem:[%s5 + $0x68] sm:$0xf]
      %v1800 = vld [vmem:[%s6] sm:$0x1]
      %vm1801 = vcmask 883712
      %v1803 = vsel %vm1801, %v1785, 0
      %vm1805 = vcmask 1043456
      %v1807 = vsel %vm1805, %v1799, 0
      %1809 = vmatprep.subr.mxu0 0.0
      %1810 = vmatpush1.msra.mxu0 0.0
      %1811 = vmatprep.subr.mxu0 0.0
      %1812 = vmatpush1.msra.mxu0 0.0
      %1813 = vmatprep.subr.mxu0 0.0
      %1814 = vmatpush1.msra.mxu0 %v1807
      %1815 = vmatprep.subr.mxu0 0.0
      %1816 = vmatpush1.msra.mxu0 %v1798
      %1817 = vmatprep.subr.mxu0 0.0
      %1818 = vmatpush1.msra.mxu0 %v1797
      %1819 = vmatprep.subr.mxu0 0.0
      %1820 = vmatpush1.msra.mxu0 %v1796
      %1821 = vmatprep.subr.mxu0 0.0
      %1822 = vmatpush1.msra.mxu0 %v1795
      %1823 = vmatprep.subr.mxu0 0.0
      %1824 = vmatpush1.msra.mxu0 %v1794
      %1825 = vmatprep.subr.mxu0 0.0
      %1826 = vmatpush1.msra.mxu0 %v1793
      %1827 = vmatprep.subr.mxu0 0.0
      %1828 = vmatpush1.msra.mxu0 %v1792
      %1829 = vmatprep.subr.mxu0 0.0
      %1830 = vmatpush1.msra.mxu0 %v1791
      %1831 = vmatprep.subr.mxu0 0.0
      %1832 = vmatpush1.msra.mxu0 %v1790
      %1833 = vmatprep.subr.mxu0 0.0
      %1834 = vmatpush1.msra.mxu0 %v1789
      %1835 = vmatprep.subr.mxu0 0.0
      %1836 = vmatpush1.msra.mxu0 %v1788
      %1837 = vmatprep.subr.mxu0 0.0
      %1838 = vmatpush1.msra.mxu0 %v1787
      %1839 = vmatprep.subr.mxu0 0.0
      %1840 = vmatpush1.msra.mxu0 %v1786
      %1841 = vmatprep.subr.mxu0 0.0
      %1842 = vmatpush2.msra.mxu0 0.0
      %1843 = vmatprep.subr.mxu0 0.0
      %1844 = vmatpush2.msra.mxu0 0.0
      %1845 = vmatprep.subr.mxu0 0.0
      %1846 = vmatpush2.msra.mxu0 0.0
      %1847 = vmatprep.subr.mxu0 0.0
      %1848 = vmatpush2.msra.mxu0 0.0
      %1849 = vmatprep.subr.mxu0 0.0
      %1850 = vmatpush2.msra.mxu0 0.0
      %1851 = vmatprep.subr.mxu0 0.0
      %1852 = vmatpush2.msra.mxu0 0.0
      %1853 = vmatprep.subr.mxu0 0.0
      %1854 = vmatpush2.msra.mxu0 0.0
      %1855 = vmatprep.subr.mxu0 0.0
      %1856 = vmatpush2.msra.mxu0 0.0
      %1857 = vmatprep.subr.mxu0 0.0
      %1858 = vmatpush2.msra.mxu0 0.0
      %1859 = vmatprep.subr.mxu0 0.0
      %1860 = vmatpush2.msra.mxu0 0.0
      %1861 = vmatprep.subr.mxu0 0.0
      %1862 = vmatpush2.msra.mxu0 0.0
      %1863 = vmatprep.subr.mxu0 0.0
      %1864 = vmatpush2.msra.mxu0 0.0
      %1865 = vmatprep.subr.mxu0 0.0
      %1866 = vmatpush2.msra.mxu0 0.0
      %1867 = vmatprep.subr.mxu0 0.0
      %1868 = vmatpush2.msra.mxu0 0.0
      %1869 = vmatprep.subr.mxu0 0.0
      %1870 = vmatpush2.msra.mxu0 0.0
      %1871 = vmatprep.subr.mxu0 0.0
      %1872 = vmatpush2.msra.mxu0 0.0
      %1873 = vmatprep.mubr.f32.mxu0 0.0
      %1874 = vmatmul.mubr.f32.gmra.mxu0 %v1803
      %v1875 = vpop.f32.mrf.mxu0
      %v1876 = vadd.f32 %v1800, %v1875
      %v1877 = vpop.f32.mrf.mxu0
      %1878 = vdwg.mxu0
      %v1879 = vmax.f32 %v1876, 0.0
      %1881 = vrot.lane.b32.xlu0 %v1879, 116
      %v1882 = vpop.permute.xlu0 %1881
      %v1884 = vmax.f32 %v1879, %v1882
      %1886 = vrot.lane.b32.xlu0 %v1884, 104
      %v1887 = vpop.permute.xlu0 %1886
      %v1889 = vmax.f32 %v1884, %v1887
      %v1890 = vld [vmem:[%s7] sm:$0xff]
      %v1891 = vld [vmem:[%s7 + $0x8] sm:$0xf]
      %v1892 = vlaneseq
      %v1893 = vshrl.u32 %v1892, 7
      %v1894 = vsub.s32 0, %v1893
      %v1895 = vrot.slane %v1889, %v1894
      %v1896 = vmul.f32 %v1890, %v1895
      %v1897 = vmul.f32 %v1891, %v1895
      %vm1898 = vcmask 97280
      %v1899 = vsel %vm1898, %v1896, 0.0
      %1900 = vadd.xlane.f32.xlu0 %v1899
      %v1901 = vpop.xlane.xlu0 %1900
      %vm1902 = vcmask 93184
      %v1903 = vsel %vm1902, %v1897, 0.0
      %1904 = vadd.xlane.f32.xlu0 %v1903
      %v1905 = vpop.xlane.xlu0 %1904
      %v1906 = vld [vmem:[%s8] sm:$0x1]
      %v1908 = vlaneseq
      %v1909 = vshrl.u32 %v1908, 7
      %v1910 = vsub.s32 0, %v1909
      %v1911 = vrot.slane %v1906, %v1910
      %v1913 = vmul.f32 %v1901, %v1911
      %v1914 = vmul.f32 %v1905, %v1911
      %v1915 = vld [vmem:[%s9] sm:$0x1]
      %v1917 = vlaneseq
      %v1918 = vshrl.u32 %v1917, 7
      %v1919 = vsub.s32 0, %v1918
      %v1920 = vrot.slane %v1915, %v1919
      %v1922 = vadd.f32 %v1913, %v1920
      %v1923 = vadd.f32 %v1914, %v1920
      %v1924 = vmax.f32 %v1922, 0.0
      %v1925 = vmax.f32 %v1923, 0.0
      %v1926 = vld [vmem:[%s10] sm:$0xff]
      %v1927 = vld [vmem:[%s10 + $0x8] sm:$0xff]
      %v1928 = vld [vmem:[%s10 + $0x10] sm:$0xff]
      %v1929 = vld [vmem:[%s10 + $0x18] sm:$0xff]
      %v1930 = vld [vmem:[%s10 + $0x20] sm:$0xff]
      %v1931 = vld [vmem:[%s10 + $0x28] sm:$0xff]
      %v1932 = vld [vmem:[%s10 + $0x30] sm:$0xff]
      %v1933 = vld [vmem:[%s10 + $0x38] sm:$0xff]
      %v1934 = vld [vmem:[%s10 + $0x40] sm:$0xff]
      %v1935 = vld [vmem:[%s10 + $0x48] sm:$0xff]
      %v1936 = vld [vmem:[%s10 + $0x50] sm:$0xff]
      %v1937 = vld [vmem:[%s10 + $0x58] sm:$0xff]
      %v1938 = vld [vmem:[%s11] sm:$0x1]
      %v1940 = vlaneseq
      %v1941 = vshrl.u32 %v1940, 7
      %v1942 = vsub.s32 0, %v1941
      %v1943 = vrot.slane %v1938, %v1942
      %vm1945 = vcmask 785408
      %v1947 = vsel %vm1945, %v1924, 0
      %v1950 = vsel %vm1945, %v1925, 0
      %1952 = vmatprep.subr.mxu0 0.0
      %1953 = vmatpush1.msra.mxu0 0.0
      %1954 = vmatprep.subr.mxu0 0.0
      %1955 = vmatpush1.msra.mxu0 0.0
      %1956 = vmatprep.subr.mxu0 0.0
      %1957 = vmatpush1.msra.mxu0 0.0
      %1958 = vmatprep.subr.mxu0 0.0
      %1959 = vmatpush1.msra.mxu0 0.0
      %1960 = vmatprep.subr.mxu0 0.0
      %1961 = vmatpush1.msra.mxu0 %v1937
      %1962 = vmatprep.subr.mxu0 0.0
      %1963 = vmatpush1.msra.mxu0 %v1936
      %1964 = vmatprep.subr.mxu0 0.0
      %1965 = vmatpush1.msra.mxu0 %v1935
      %1966 = vmatprep.subr.mxu0 0.0
      %1967 = vmatpush1.msra.mxu0 %v1934
      %1968 = vmatprep.subr.mxu0 0.0
      %1969 = vmatpush1.msra.mxu0 %v1933
      %1970 = vmatprep.subr.mxu0 0.0
      %1971 = vmatpush1.msra.mxu0 %v1932
      %1972 = vmatprep.subr.mxu0 0.0
      %1973 = vmatpush1.msra.mxu0 %v1931
      %1974 = vmatprep.subr.mxu0 0.0
      %1975 = vmatpush1.msra.mxu0 %v1930
      %1976 = vmatprep.subr.mxu0 0.0
      %1977 = vmatpush1.msra.mxu0 %v1929
      %1978 = vmatprep.subr.mxu0 0.0
      %1979 = vmatpush1.msra.mxu0 %v1928
      %1980 = vmatprep.subr.mxu0 0.0
      %1981 = vmatpush1.msra.mxu0 %v1927
      %1982 = vmatprep.subr.mxu0 0.0
      %1983 = vmatpush1.msra.mxu0 %v1926
      %1984 = vmatprep.subr.mxu0 0.0
      %1985 = vmatpush2.msra.mxu0 0.0
      %1986 = vmatprep.subr.mxu0 0.0
      %1987 = vmatpush2.msra.mxu0 0.0
      %1988 = vmatprep.subr.mxu0 0.0
      %1989 = vmatpush2.msra.mxu0 0.0
      %1990 = vmatprep.subr.mxu0 0.0
      %1991 = vmatpush2.msra.mxu0 0.0
      %1992 = vmatprep.subr.mxu0 0.0
      %1993 = vmatpush2.msra.mxu0 0.0
      %1994 = vmatprep.subr.mxu0 0.0
      %1995 = vmatpush2.msra.mxu0 0.0
      %1996 = vmatprep.subr.mxu0 0.0
      %1997 = vmatpush2.msra.mxu0 0.0
      %1998 = vmatprep.subr.mxu0 0.0
      %1999 = vmatpush2.msra.mxu0 0.0
      %2000 = vmatprep.subr.mxu0 0.0
      %2001 = vmatpush2.msra.mxu0 0.0
      %2002 = vmatprep.subr.mxu0 0.0
      %2003 = vmatpush2.msra.mxu0 0.0
      %2004 = vmatprep.subr.mxu0 0.0
      %2005 = vmatpush2.msra.mxu0 0.0
      %2006 = vmatprep.subr.mxu0 0.0
      %2007 = vmatpush2.msra.mxu0 0.0
      %2008 = vmatprep.subr.mxu0 0.0
      %2009 = vmatpush2.msra.mxu0 0.0
      %2010 = vmatprep.subr.mxu0 0.0
      %2011 = vmatpush2.msra.mxu0 0.0
      %2012 = vmatprep.subr.mxu0 0.0
      %2013 = vmatpush2.msra.mxu0 0.0
      %2014 = vmatprep.subr.mxu0 0.0
      %2015 = vmatpush2.msra.mxu0 0.0
      %2016 = vmatprep.mubr.f32.mxu0 0.0
      %2017 = vmatmul.mubr.f32.gmra.mxu0 %v1947
      %v2018 = vpop.f32.mrf.mxu0
      %v2019 = vadd.f32 %v1943, %v2018
      %v2020 = vpop.f32.mrf.mxu0
      %2021 = vmatprep.mubr.f32.mxu0 0.0
      %2022 = vmatmul.mubr.f32.gmra.mxu0 %v1950
      %v2023 = vpop.f32.mrf.mxu0
      %v2024 = vadd.f32 %v1943, %v2023
      %v2025 = vpop.f32.mrf.mxu0
      %2026 = vdwg.mxu0
      %v2027 = vmax.f32 %v2019, 0.0
      %v2028 = vmax.f32 %v2024, 0.0
      %v2029 = vld [vmem:[%s12] sm:$0xff]
      %vm2030 = vcmask 64512
      %v2032 = vsel %vm2030, %v2027, 0
      %v2035 = vsel %vm2030, %v2028, 0
      %2037 = vmatprep.subr.mxu0 0.0
      %2038 = vmatpush1.msra.mxu0 0.0
      %2039 = vmatprep.subr.mxu0 0.0
      %2040 = vmatpush1.msra.mxu0 0.0
      %2041 = vmatprep.subr.mxu0 0.0
      %2042 = vmatpush1.msra.mxu0 0.0
      %2043 = vmatprep.subr.mxu0 0.0
      %2044 = vmatpush1.msra.mxu0 0.0
      %2045 = vmatprep.subr.mxu0 0.0
      %2046 = vmatpush1.msra.mxu0 0.0
      %2047 = vmatprep.subr.mxu0 0.0
      %2048 = vmatpush1.msra.mxu0 0.0
      %2049 = vmatprep.subr.mxu0 0.0
      %2050 = vmatpush1.msra.mxu0 0.0
      %2051 = vmatprep.subr.mxu0 0.0
      %2052 = vmatpush1.msra.mxu0 0.0
      %2053 = vmatprep.subr.mxu0 0.0
      %2054 = vmatpush1.msra.mxu0 0.0
      %2055 = vmatprep.subr.mxu0 0.0
      %2056 = vmatpush1.msra.mxu0 0.0
      %2057 = vmatprep.subr.mxu0 0.0
      %2058 = vmatpush1.msra.mxu0 0.0
      %2059 = vmatprep.subr.mxu0 0.0
      %2060 = vmatpush1.msra.mxu0 0.0
      %2061 = vmatprep.subr.mxu0 0.0
      %2062 = vmatpush1.msra.mxu0 0.0
      %2063 = vmatprep.subr.mxu0 0.0
      %2064 = vmatpush1.msra.mxu0 0.0
      %2065 = vmatprep.subr.mxu0 0.0
      %2066 = vmatpush1.msra.mxu0 0.0
      %2067 = vmatprep.subr.mxu0 0.0
      %2068 = vmatpush1.msra.mxu0 %v2029
      %2069 = vmatprep.subr.mxu0 0.0
      %2070 = vmatpush2.msra.mxu0 0.0
      %2071 = vmatprep.subr.mxu0 0.0
      %2072 = vmatpush2.msra.mxu0 0.0
      %2073 = vmatprep.subr.mxu0 0.0
      %2074 = vmatpush2.msra.mxu0 0.0
      %2075 = vmatprep.subr.mxu0 0.0
      %2076 = vmatpush2.msra.mxu0 0.0
      %2077 = vmatprep.subr.mxu0 0.0
      %2078 = vmatpush2.msra.mxu0 0.0
      %2079 = vmatprep.subr.mxu0 0.0
      %2080 = vmatpush2.msra.mxu0 0.0
      %2081 = vmatprep.subr.mxu0 0.0
      %2082 = vmatpush2.msra.mxu0 0.0
      %2083 = vmatprep.subr.mxu0 0.0
      %2084 = vmatpush2.msra.mxu0 0.0
      %2085 = vmatprep.subr.mxu0 0.0
      %2086 = vmatpush2.msra.mxu0 0.0
      %2087 = vmatprep.subr.mxu0 0.0
      %2088 = vmatpush2.msra.mxu0 0.0
      %2089 = vmatprep.subr.mxu0 0.0
      %2090 = vmatpush2.msra.mxu0 0.0
      %2091 = vmatprep.subr.mxu0 0.0
      %2092 = vmatpush2.msra.mxu0 0.0
      %2093 = vmatprep.subr.mxu0 0.0
      %2094 = vmatpush2.msra.mxu0 0.0
      %2095 = vmatprep.subr.mxu0 0.0
      %2096 = vmatpush2.msra.mxu0 0.0
      %2097 = vmatprep.subr.mxu0 0.0
      %2098 = vmatpush2.msra.mxu0 0.0
      %2099 = vmatprep.subr.mxu0 0.0
      %2100 = vmatpush2.msra.mxu0 0.0
      %2101 = vmatprep.mubr.f32.mxu0 0.0
      %2102 = vmatmul.mubr.f32.gmra.mxu0 %v2032
      %v2103 = vpop.f32.mrf.mxu0
      %v2104 = vadd.f32 0.0, %v2103
      %v2105 = vpop.f32.mrf.mxu0
      %2106 = vmatprep.mubr.f32.mxu0 0.0
      %2107 = vmatmul.mubr.f32.gmra.mxu0 %v2035
      %v2108 = vpop.f32.mrf.mxu0
      %v2109 = vadd.f32 0.0, %v2108
      %v2110 = vpop.f32.mrf.mxu0
      %2111 = vdwg.mxu0
      %v2112 = vlaneseq
      %v2113 = vshrl.u32 %v2112, 7
      %v2114 = vadd.s32 %v2113, 8
      %vm2115 = vcmp.lt.s32.totalorder %v2113, 6
      %vm2116 = vcmp.lt.s32.totalorder %v2114, 6
      %v2117 = vxor.u32 %v2104, 2147483648
      %v2118 = vxor.u32 %v2109, 2147483648
      %v2119 = vmul.f32 %v2117, 1.442695
      %v2120 = vpow.pop %v2119
      %v2121 = vmul.f32 %v2118, 1.442695
      %v2122 = vpow.pop %v2121
      %v2123 = vadd.f32 %v2120, 1.0
      %v2124 = vadd.f32 %v2122, 1.0
      %v2125 = vrcp.pop %v2123
      %v2126 = vmul.f32 1.0, %v2125
      %v2127 = vrcp.pop %v2124
      %v2128 = vmul.f32 1.0, %v2127
      %v2129 = vtanh.pop %v2104
      %v2130 = vtanh.pop %v2109
      %v2131 = vsel %vm2115, %v2126, %v2129
      %v2132 = vsel %vm2116, %v2128, %v2130
      %vm2133 = vcmask 31744
      %2134 = vst.msk [vmem:[%s437] sm:$0xff] %vm2133, %v2131
      %vm2135 = vcmask 27648
      %2136 = vst.msk [vmem:[%s437 + $0x8] sm:$0xf] %vm2135, %v2132
      %p2137 = scmp.lt.s32.totalorder %s24, 1
      %s2138 = scalar_select %p2137, %s24, 1
      %s2139 = smul.addr %s2138, 2
      %s2140 = smul.addr %s2139, 8
      %s2141 = scalar_lea.vmem %s13, %s2140
      // Predicated region
      $region73: #{anchor_box_predictor_forward.1} parent=71 // pred_check
        %p2142 = pneg %p320
      $region74: #{anchor_box_predictor_forward.1} parent=71 // pred_check_branch
        %2144 = sbr.rel (%p2142) target = $region76
      $region75: #{anchor_box_predictor_forward.1} parent=71 // pred_region
        _
      $region76: #{anchor_box_predictor_forward.1} parent=71 // pred_fallthru
        _
    $region72: #{anchor_box_predictor_forward.1} parent=5 // pred_fallthru
      _
    %p2145 = scmp.le.s32.totalorder 2, %s19
    // Predicated region
    $region77: #{anchor_box_predictor_forward.1} parent=5 // pred_check
      %p2146 = pneg %p2145
    $region78: #{anchor_box_predictor_forward.1} parent=5 // pred_check_branch
      %2148 = sbr.rel (%p2146) target = $region80
    $region79: #{anchor_box_predictor_forward.1} parent=5 // pred_region
      %s2149 = ssub.s32 %s19, 2
      // Predicated region
      $region81: #{anchor_box_predictor_forward.1} parent=79 // pred_check
        %p2150 = pneg %p326
      $region82: #{anchor_box_predictor_forward.1} parent=79 // pred_check_branch
        %2152 = sbr.rel (%p2150) target = $region84
      $region83: #{anchor_box_predictor_forward.1} parent=79 // pred_region
        %p2153 = scmp.lt.s32.totalorder %s25, 1
        %s2154 = scalar_select %p2153, %s25, 1
        %s2155 = smul.addr %s2154, 2
        %s2156 = smul.addr %s2155, 8
        %s2157 = scalar_lea.vmem %s13, %s2156
      $region84: #{anchor_box_predictor_forward.1} parent=79 // pred_fallthru
        _
    $region80: #{anchor_box_predictor_forward.1} parent=5 // pred_fallthru
      _
  $region6: #{anchor_box_predictor_forward.1} parent=0 // loop_footer
    %s23 = sadd.s32 1, %s19
  $region7: #{anchor_box_predictor_forward.1} parent=0 // loop_footer_branch
    %18 = sbr.rel target = $region3
  $region8: #{anchor_box_predictor_forward.1} parent=0 // loop_exit
    _

</llo_original>
